<compile_context>
chip_gen: v6e
topology: v6e:2x2x1
jax: 0.10.0
libtpu: 0.0.40
codegen_flags: <defaults>
</compile_context>

<pallas_src>
import functools

import jax
import jax.numpy as jnp
import numpy as np
from jax.experimental import pallas as pl
from jax.experimental.pallas import tpu as pltpu


# ---------------------------------------------------------------------------
# JAX helpers used only by the pure-JAX reference (verification)
# ---------------------------------------------------------------------------
def window_partition(x, ws):
    B, H, W, C = x.shape
    x = x.reshape(B, H // ws, ws, W // ws, ws, C)
    return x.transpose(0, 1, 3, 2, 4, 5).reshape(-1, ws, ws, C)


def window_reverse(windows, ws, H, W):
    B = windows.shape[0] // (H * W // ws // ws)
    x = windows.reshape(B, H // ws, W // ws, ws, ws, -1)
    return x.transpose(0, 1, 3, 2, 4, 5).reshape(B, H, W, -1)


# ---------------------------------------------------------------------------
# Pallas kernel: one whole batch element (C, P) per grid step, both blocks +
# residuals of a SpatialAB stage fused.  Pixels (P = H*W) live on the lane
# axis; channels (C) on the sublane axis.
# ---------------------------------------------------------------------------
def spatial_ab_pair_kernel(x_ref,
                           g1a_ref, b1a_ref, g2a_ref, b2a_ref, wpa_ref, bpa_ref,
                           mta_ref, ma_ref,
                           g1b_ref, b1b_ref, g2b_ref, b2b_ref, wpb_ref, bpb_ref,
                           mtb_ref, mb_ref,
                           o_ref, *, inv_win, eps):
    x = x_ref[0].astype(jnp.float32)                      # (C, P)

    def swin_block(x, g1, b1, g2, b2, wpT, bp, mt, m):
        # ---- channel LayerNorm: reduce over C (sublane axis), per pixel ----
        mu = jnp.mean(x, axis=0, keepdims=True)                          # (1, P)
        xc = x - mu
        var = jnp.mean(xc * xc, axis=0, keepdims=True)
        y = xc * jax.lax.rsqrt(var + eps) * g1 + b1                      # (C, P)

        # ---- spatial LayerNorm over each (shifted) window's ws*ws pixels,
        #      per channel.  Window membership is a constant 0/1 matrix; the
        #      grouped reductions and the broadcast-back run on the MXU.
        #      One-pass moments -> the two stats matmuls are independent. ----
        yy = y * y
        s1 = jnp.dot(y, mt, preferred_element_type=jnp.float32) * inv_win   # (C, nw)
        s2 = jnp.dot(yy, mt, preferred_element_type=jnp.float32) * inv_win  # (C, nw)
        w_mean = s1
        w_rstd = jax.lax.rsqrt(jnp.maximum(s2 - s1 * s1, 0.0) + eps)        # (C, nw)
        mean_p = jnp.dot(w_mean, m, preferred_element_type=jnp.float32)     # (C, P)
        rstd_p = jnp.dot(w_rstd, m, preferred_element_type=jnp.float32)     # (C, P)
        z = (y - mean_p) * rstd_p * g2 + b2                                  # (C, P)

        # ---- proj: Linear(C, C, bias) over channels; P stays on lanes ----
        return jnp.dot(wpT, z, preferred_element_type=jnp.float32) + bp     # (C, P)

    # SpatialAB: x = attn1(x) + x ; x = attn2(x) + x
    x = swin_block(x, g1a_ref[...], b1a_ref[...], g2a_ref[...], b2a_ref[...],
                   wpa_ref[...], bpa_ref[...], mta_ref[...], ma_ref[...]) + x
    x = swin_block(x, g1b_ref[...], b1b_ref[...], g2b_ref[...], b2b_ref[...],
                   wpb_ref[...], bpb_ref[...], mtb_ref[...], mb_ref[...]) + x
    o_ref[0] = x.astype(o_ref.dtype)


# ---------------------------------------------------------------------------
# SpatialAB pair (attn1 shift=0 + attn2 shift=ws//2, both residuals), Pallas
# ---------------------------------------------------------------------------
class SpatialABPairPallas:
    def __init__(self, dim, input_resolution, window_size=8, key=None):
        self.dim = dim
        self.H, self.W = input_resolution
        self.ws = window_size
        self.eps = 1e-5
        ws = window_size
        assert self.H % ws == 0 and self.W % ws == 0
        self.P = self.H * self.W                 # pixels per image (lane axis)
        self.nw = (self.H // ws) * (self.W // ws)  # windows per image

        key = jax.random.PRNGKey(0) if key is None else key
        keys = jax.random.split(key, 12)
        self.params = []
        for i, shift in enumerate((0, ws // 2)):   # SpatialAB: shift 0 then ws//2
            k = keys[6 * i:6 * (i + 1)]
            self.params.append(dict(
                shift=shift,
                # nn.LayerNorm(dim)
                g1=1.0 + 0.1 * jax.random.normal(k[0], (dim,), jnp.float32),
                b1=0.1 * jax.random.normal(k[1], (dim,), jnp.float32),
                # SpatialMLP.LN = nn.LayerNorm(window_size**2)
                g2=1.0 + 0.1 * jax.random.normal(k[2], (ws * ws,), jnp.float32),
                b2=0.1 * jax.random.normal(k[3], (ws * ws,), jnp.float32),
                # SpatialMLP.proj = nn.Linear(dim, dim, bias=True); y = x @ wp + bp
                wp=0.02 * jax.random.normal(k[4], (dim, dim), jnp.float32),
                bp=0.02 * jax.random.normal(k[5], (dim,), jnp.float32),
            ))

        # Static layout tables: for every pixel, the (shifted) window it belongs
        # to and its intra-window position.  Folding the cyclic shift into these
        # tables makes roll / partition / reverse / roll-back a no-op.
        const = lambda b: (0, 0)
        self.kernel_operands, self.operand_specs = [], []
        for p in self.params:
            mt, n = self._window_tables(p["shift"])
            ops = [
                p["g1"].reshape(dim, 1),                      # channel-LN gamma (C,1)
                p["b1"].reshape(dim, 1),                      # channel-LN beta  (C,1)
                jnp.asarray(np.asarray(p["g2"])[n][None, :]),  # spatial-LN gamma, lane-dense (1,P)
                jnp.asarray(np.asarray(p["b2"])[n][None, :]),  # spatial-LN beta,  lane-dense (1,P)
                jnp.transpose(p["wp"]),                        # proj weight as (C_out, C_in)
                p["bp"].reshape(dim, 1),                       # proj bias (C,1)
                jnp.asarray(mt),                               # pixel -> window  (P, nw)
                jnp.asarray(mt.T.copy()),                      # window -> pixel  (nw, P)
            ]
            self.kernel_operands += ops
            self.operand_specs += [pl.BlockSpec(o.shape, const) for o in ops]

    def _window_tables(self, shift):
        H, W, ws = self.H, self.W, self.ws
        p = np.arange(self.P)
        h, w = p // W, p % W
        hs = (h - shift) % H                      # position in the shifted frame
        wcs = (w - shift) % W
        j = (hs // ws) * (W // ws) + (wcs // ws)  # shifted-window index
        n = (hs % ws) * ws + (wcs % ws)           # intra-window position (LN param idx)
        mt = np.zeros((self.P, self.nw), np.float32)
        mt[p, j] = 1.0
        return mt, n

    # -- Pallas forward: input/output are the model-native NCHW ------------
    def __call__(self, x):
        B, C, H, W = x.shape
        assert (H, W) == (self.H, self.W) and C == self.dim
        P, nw = self.P, self.nw
        xs = x.reshape(B, C, P)     # pure reshape: NCHW already has pixels lane-major

        kernel = functools.partial(spatial_ab_pair_kernel,
                                   inv_win=1.0 / float(self.ws * self.ws),
                                   eps=self.eps)

        flops = int(B * 2 * (2 * C * C * P + 4 * 2 * C * P * nw + 12 * C * P))
        transcendentals = int(B * 2 * (P + C * nw))
        param_bytes = int(sum(int(o.size) for o in self.kernel_operands) * 4)
        bytes_accessed = int(2 * B * C * P * 4 + param_bytes)

        out = pl.pallas_call(
            kernel,
            out_shape=jax.ShapeDtypeStruct((B, C, P), x.dtype),
            grid=(B,),
            in_specs=[pl.BlockSpec((1, C, P), lambda b: (b, 0, 0))]
                     + self.operand_specs,
            out_specs=pl.BlockSpec((1, C, P), lambda b: (b, 0, 0)),
            compiler_params=pltpu.CompilerParams(
                dimension_semantics=("parallel",)),
            cost_estimate=pl.CostEstimate(flops=flops,
                                          transcendentals=transcendentals,
                                          bytes_accessed=bytes_accessed),
        )(xs, *self.kernel_operands)
        return out.reshape(B, C, H, W)

    # -- pure-JAX reference (mirrors the PyTorch forward) -------------------
    def _block_reference(self, x, idx):
        p = self.params[idx]
        ws, N, C, eps = self.ws, self.ws * self.ws, self.dim, self.eps
        B, H, W, _ = x.shape
        # nn.LayerNorm(dim)
        mu = x.mean(-1, keepdims=True)
        var = ((x - mu) ** 2).mean(-1, keepdims=True)
        xn = (x - mu) * jax.lax.rsqrt(var + eps) * p["g1"] + p["b1"]
        if p["shift"] > 0:
            xn = jnp.roll(xn, shift=(-p["shift"], -p["shift"]), axis=(1, 2))
        xw = window_partition(xn, ws).reshape(-1, N, C)
        # SpatialMLP: LN over the N window positions (per channel), then proj
        t = jnp.transpose(xw, (0, 2, 1))                       # (nWB, C, N)
        mu2 = t.mean(-1, keepdims=True)
        var2 = ((t - mu2) ** 2).mean(-1, keepdims=True)
        tn = (t - mu2) * jax.lax.rsqrt(var2 + eps) * p["g2"] + p["b2"]
        z = jnp.transpose(tn, (0, 2, 1))                       # (nWB, N, C)
        out = z @ p["wp"] + p["bp"]
        out = window_reverse(out.reshape(-1, ws, ws, C), ws, H, W)
        if p["shift"] > 0:
            out = jnp.roll(out, shift=(p["shift"], p["shift"]), axis=(1, 2))
        return out

    def reference(self, x_bchw):
        y = jnp.transpose(x_bchw, (0, 2, 3, 1))
        y = self._block_reference(y, 0) + y
        y = self._block_reference(y, 1) + y
        return jnp.transpose(y, (0, 3, 1, 2))


if __name__ == "__main__":
    # Shapes consistent with Spatial_block's stage-0 SpatialAB: dim=28, ws=8,
    # a 16x16 spatial grid, batch 2, model-native channels-first layout.
    B, C, H, W = 2, 28, 16, 16
    ws = 8
    key = jax.random.PRNGKey(0)
    kx, kp = jax.random.split(key)
    x_bchw = jax.random.normal(kx, (B, C, H, W), jnp.float32)

    pair = SpatialABPairPallas(C, (H, W), window_size=ws, key=kp)

    pallas_forward = jax.jit(pair.__call__)
    ref_forward = jax.jit(pair.reference)

    out = jax.block_until_ready(pallas_forward(x_bchw))
    ref = jax.block_until_ready(ref_forward(x_bchw))

    np.testing.assert_allclose(np.asarray(out), np.asarray(ref),
                               atol=1e-4, rtol=1e-4)
    assert out.shape == (B, C, H, W)
    # TODO(synk): the PreNorm+FeedForward conv-MLP (1x1 + depthwise 3x3 convs),
    # the U-Net down/up-sampling convs, ConvTranspose2d and bicubic
    # interpolation of Spatial_block are standard XLA conv/resize ops and are
    # not lowered to Pallas here; only the custom SwinSpatialBlock pair is.
    print("KERNEL_OK")
</pallas_src>

<mosaic_0001>
module attributes {stable_mosaic.version = 11 : i64} {
  func.func @spatial_ab_pair_kernel(%arg0: i32, %arg1: memref<1x28x256xf32, #tpu.memory_space<vmem>>, %arg2: memref<28x1xf32, #tpu.memory_space<vmem>>, %arg3: memref<28x1xf32, #tpu.memory_space<vmem>>, %arg4: memref<1x256xf32, #tpu.memory_space<vmem>>, %arg5: memref<1x256xf32, #tpu.memory_space<vmem>>, %arg6: memref<28x28xf32, #tpu.memory_space<vmem>>, %arg7: memref<28x1xf32, #tpu.memory_space<vmem>>, %arg8: memref<256x4xf32, #tpu.memory_space<vmem>>, %arg9: memref<4x256xf32, #tpu.memory_space<vmem>>, %arg10: memref<28x1xf32, #tpu.memory_space<vmem>>, %arg11: memref<28x1xf32, #tpu.memory_space<vmem>>, %arg12: memref<1x256xf32, #tpu.memory_space<vmem>>, %arg13: memref<1x256xf32, #tpu.memory_space<vmem>>, %arg14: memref<28x28xf32, #tpu.memory_space<vmem>>, %arg15: memref<28x1xf32, #tpu.memory_space<vmem>>, %arg16: memref<256x4xf32, #tpu.memory_space<vmem>>, %arg17: memref<4x256xf32, #tpu.memory_space<vmem>>, %arg18: memref<1x28x256xf32, #tpu.memory_space<vmem>>) attributes {dimension_semantics = [#tpu.dimension_semantics<parallel>], iteration_bounds = array<i64: 2>, scalar_prefetch = 0 : i64, scratch_operands = 0 : i64, tpu.core_type = #tpu.core_type<tc>, window_params = [{transform_indices = @transform_0, window_bounds = array<i64: 1, 28, 256>}, {pipeline_mode = #tpu.pipeline_mode<synchronous>, transform_indices = @transform_1, window_bounds = array<i64: 28, 1>}, {pipeline_mode = #tpu.pipeline_mode<synchronous>, transform_indices = @transform_2, window_bounds = array<i64: 28, 1>}, {pipeline_mode = #tpu.pipeline_mode<synchronous>, transform_indices = @transform_3, window_bounds = array<i64: 1, 256>}, {pipeline_mode = #tpu.pipeline_mode<synchronous>, transform_indices = @transform_4, window_bounds = array<i64: 1, 256>}, {pipeline_mode = #tpu.pipeline_mode<synchronous>, transform_indices = @transform_5, window_bounds = array<i64: 28, 28>}, {pipeline_mode = #tpu.pipeline_mode<synchronous>, transform_indices = @transform_6, window_bounds = array<i64: 28, 1>}, {pipeline_mode = #tpu.pipeline_mode<synchronous>, transform_indices = @transform_7, window_bounds = array<i64: 256, 4>}, {pipeline_mode = #tpu.pipeline_mode<synchronous>, transform_indices = @transform_8, window_bounds = array<i64: 4, 256>}, {pipeline_mode = #tpu.pipeline_mode<synchronous>, transform_indices = @transform_9, window_bounds = array<i64: 28, 1>}, {pipeline_mode = #tpu.pipeline_mode<synchronous>, transform_indices = @transform_10, window_bounds = array<i64: 28, 1>}, {pipeline_mode = #tpu.pipeline_mode<synchronous>, transform_indices = @transform_11, window_bounds = array<i64: 1, 256>}, {pipeline_mode = #tpu.pipeline_mode<synchronous>, transform_indices = @transform_12, window_bounds = array<i64: 1, 256>}, {pipeline_mode = #tpu.pipeline_mode<synchronous>, transform_indices = @transform_13, window_bounds = array<i64: 28, 28>}, {pipeline_mode = #tpu.pipeline_mode<synchronous>, transform_indices = @transform_14, window_bounds = array<i64: 28, 1>}, {pipeline_mode = #tpu.pipeline_mode<synchronous>, transform_indices = @transform_15, window_bounds = array<i64: 256, 4>}, {pipeline_mode = #tpu.pipeline_mode<synchronous>, transform_indices = @transform_16, window_bounds = array<i64: 4, 256>}, {transform_indices = @transform_17, window_bounds = array<i64: 1, 28, 256>}]} {
    %c0 = arith.constant 0 : index
    %c0_0 = arith.constant 0 : index
    %c0_1 = arith.constant 0 : index
    %0 = vector.load %arg1[%c0, %c0_0, %c0_1] : memref<1x28x256xf32, #tpu.memory_space<vmem>>, vector<1x28x256xf32>
    %1 = vector.shape_cast %0 : vector<1x28x256xf32> to vector<28x256xf32>
    %c0_2 = arith.constant 0 : index
    %c0_3 = arith.constant 0 : index
    %2 = vector.load %arg2[%c0_2, %c0_3] : memref<28x1xf32, #tpu.memory_space<vmem>>, vector<28x1xf32>
    %c0_4 = arith.constant 0 : index
    %c0_5 = arith.constant 0 : index
    %3 = vector.load %arg3[%c0_4, %c0_5] : memref<28x1xf32, #tpu.memory_space<vmem>>, vector<28x1xf32>
    %c0_6 = arith.constant 0 : index
    %c0_7 = arith.constant 0 : index
    %4 = vector.load %arg4[%c0_6, %c0_7] : memref<1x256xf32, #tpu.memory_space<vmem>>, vector<1x256xf32>
    %c0_8 = arith.constant 0 : index
    %c0_9 = arith.constant 0 : index
    %5 = vector.load %arg5[%c0_8, %c0_9] : memref<1x256xf32, #tpu.memory_space<vmem>>, vector<1x256xf32>
    %c0_10 = arith.constant 0 : index
    %c0_11 = arith.constant 0 : index
    %6 = vector.load %arg6[%c0_10, %c0_11] : memref<28x28xf32, #tpu.memory_space<vmem>>, vector<28x28xf32>
    %c0_12 = arith.constant 0 : index
    %c0_13 = arith.constant 0 : index
    %7 = vector.load %arg7[%c0_12, %c0_13] : memref<28x1xf32, #tpu.memory_space<vmem>>, vector<28x1xf32>
    %c0_14 = arith.constant 0 : index
    %c0_15 = arith.constant 0 : index
    %8 = vector.load %arg8[%c0_14, %c0_15] : memref<256x4xf32, #tpu.memory_space<vmem>>, vector<256x4xf32>
    %c0_16 = arith.constant 0 : index
    %c0_17 = arith.constant 0 : index
    %9 = vector.load %arg9[%c0_16, %c0_17] : memref<4x256xf32, #tpu.memory_space<vmem>>, vector<4x256xf32>
    %cst = arith.constant dense<0.000000e+00> : vector<256xf32>
    %10 = vector.multi_reduction <add>, %1, %cst [0] : vector<28x256xf32> to vector<256xf32>
    %11 = vector.shape_cast %10 : vector<256xf32> to vector<1x256xf32>
    %cst_18 = arith.constant 2.800000e+01 : f32
    %12 = vector.broadcast %cst_18 : f32 to vector<1x256xf32>
    %13 = arith.divf %11, %12 : vector<1x256xf32>
    %14 = vector.broadcast %13 : vector<1x256xf32> to vector<28x256xf32>
    %15 = arith.subf %1, %14 : vector<28x256xf32>
    %16 = arith.mulf %15, %15 : vector<28x256xf32>
    %cst_19 = arith.constant dense<0.000000e+00> : vector<256xf32>
    %17 = vector.multi_reduction <add>, %16, %cst_19 [0] : vector<28x256xf32> to vector<256xf32>
    %18 = vector.shape_cast %17 : vector<256xf32> to vector<1x256xf32>
    %cst_20 = arith.constant 2.800000e+01 : f32
    %19 = vector.broadcast %cst_20 : f32 to vector<1x256xf32>
    %20 = arith.divf %18, %19 : vector<1x256xf32>
    %cst_21 = arith.constant 9.99999974E-6 : f32
    %21 = vector.broadcast %cst_21 : f32 to vector<1x256xf32>
    %22 = arith.addf %20, %21 : vector<1x256xf32>
    %23 = math.rsqrt %22 : vector<1x256xf32>
    %24 = vector.broadcast %23 : vector<1x256xf32> to vector<28x256xf32>
    %25 = arith.mulf %15, %24 : vector<28x256xf32>
    %26 = vector.broadcast %2 : vector<28x1xf32> to vector<28x256xf32>
    %27 = arith.mulf %25, %26 : vector<28x256xf32>
    %28 = vector.broadcast %3 : vector<28x1xf32> to vector<28x256xf32>
    %29 = arith.addf %27, %28 : vector<28x256xf32>
    %30 = arith.mulf %29, %29 : vector<28x256xf32>
    %cst_22 = arith.constant dense<0.000000e+00> : vector<28x4xf32>
    %31 = tpu.matmul %29, %8, %cst_22 {dimension_numbers = #tpu.dot_dimension_numbers<[1], [0], [0], [1], [0, 0, 1, 1], [], []>} : vector<28x256xf32>, vector<256x4xf32>, vector<28x4xf32> -> vector<28x4xf32>
    %cst_23 = arith.constant 1.562500e-02 : f32
    %32 = vector.broadcast %cst_23 : f32 to vector<28x4xf32>
    %33 = arith.mulf %31, %32 : vector<28x4xf32>
    %cst_24 = arith.constant dense<0.000000e+00> : vector<28x4xf32>
    %34 = tpu.matmul %30, %8, %cst_24 {dimension_numbers = #tpu.dot_dimension_numbers<[1], [0], [0], [1], [0, 0, 1, 1], [], []>} : vector<28x256xf32>, vector<256x4xf32>, vector<28x4xf32> -> vector<28x4xf32>
    %cst_25 = arith.constant 1.562500e-02 : f32
    %35 = vector.broadcast %cst_25 : f32 to vector<28x4xf32>
    %36 = arith.mulf %34, %35 : vector<28x4xf32>
    %37 = arith.mulf %33, %33 : vector<28x4xf32>
    %38 = arith.subf %36, %37 : vector<28x4xf32>
    %cst_26 = arith.constant 0.000000e+00 : f32
    %39 = vector.broadcast %cst_26 : f32 to vector<28x4xf32>
    %40 = arith.maximumf %38, %39 : vector<28x4xf32>
    %cst_27 = arith.constant 9.99999974E-6 : f32
    %41 = vector.broadcast %cst_27 : f32 to vector<28x4xf32>
    %42 = arith.addf %40, %41 : vector<28x4xf32>
    %43 = math.rsqrt %42 : vector<28x4xf32>
    %cst_28 = arith.constant dense<0.000000e+00> : vector<28x256xf32>
    %44 = tpu.matmul %33, %9, %cst_28 {dimension_numbers = #tpu.dot_dimension_numbers<[1], [0], [0], [1], [0, 0, 1, 1], [], []>} : vector<28x4xf32>, vector<4x256xf32>, vector<28x256xf32> -> vector<28x256xf32>
    %cst_29 = arith.constant dense<0.000000e+00> : vector<28x256xf32>
    %45 = tpu.matmul %43, %9, %cst_29 {dimension_numbers = #tpu.dot_dimension_numbers<[1], [0], [0], [1], [0, 0, 1, 1], [], []>} : vector<28x4xf32>, vector<4x256xf32>, vector<28x256xf32> -> vector<28x256xf32>
    %46 = arith.subf %29, %44 : vector<28x256xf32>
    %47 = arith.mulf %46, %45 : vector<28x256xf32>
    %48 = vector.broadcast %4 : vector<1x256xf32> to vector<28x256xf32>
    %49 = arith.mulf %47, %48 : vector<28x256xf32>
    %50 = vector.broadcast %5 : vector<1x256xf32> to vector<28x256xf32>
    %51 = arith.addf %49, %50 : vector<28x256xf32>
    %cst_30 = arith.constant dense<0.000000e+00> : vector<28x256xf32>
    %52 = tpu.matmul %6, %51, %cst_30 {dimension_numbers = #tpu.dot_dimension_numbers<[1], [0], [0], [1], [0, 0, 1, 1], [], []>} : vector<28x28xf32>, vector<28x256xf32>, vector<28x256xf32> -> vector<28x256xf32>
    %53 = vector.broadcast %7 : vector<28x1xf32> to vector<28x256xf32>
    %54 = arith.addf %52, %53 : vector<28x256xf32>
    %55 = arith.addf %54, %1 : vector<28x256xf32>
    %c0_31 = arith.constant 0 : index
    %c0_32 = arith.constant 0 : index
    %56 = vector.load %arg10[%c0_31, %c0_32] : memref<28x1xf32, #tpu.memory_space<vmem>>, vector<28x1xf32>
    %c0_33 = arith.constant 0 : index
    %c0_34 = arith.constant 0 : index
    %57 = vector.load %arg11[%c0_33, %c0_34] : memref<28x1xf32, #tpu.memory_space<vmem>>, vector<28x1xf32>
    %c0_35 = arith.constant 0 : index
    %c0_36 = arith.constant 0 : index
    %58 = vector.load %arg12[%c0_35, %c0_36] : memref<1x256xf32, #tpu.memory_space<vmem>>, vector<1x256xf32>
    %c0_37 = arith.constant 0 : index
    %c0_38 = arith.constant 0 : index
    %59 = vector.load %arg13[%c0_37, %c0_38] : memref<1x256xf32, #tpu.memory_space<vmem>>, vector<1x256xf32>
    %c0_39 = arith.constant 0 : index
    %c0_40 = arith.constant 0 : index
    %60 = vector.load %arg14[%c0_39, %c0_40] : memref<28x28xf32, #tpu.memory_space<vmem>>, vector<28x28xf32>
    %c0_41 = arith.constant 0 : index
    %c0_42 = arith.constant 0 : index
    %61 = vector.load %arg15[%c0_41, %c0_42] : memref<28x1xf32, #tpu.memory_space<vmem>>, vector<28x1xf32>
    %c0_43 = arith.constant 0 : index
    %c0_44 = arith.constant 0 : index
    %62 = vector.load %arg16[%c0_43, %c0_44] : memref<256x4xf32, #tpu.memory_space<vmem>>, vector<256x4xf32>
    %c0_45 = arith.constant 0 : index
    %c0_46 = arith.constant 0 : index
    %63 = vector.load %arg17[%c0_45, %c0_46] : memref<4x256xf32, #tpu.memory_space<vmem>>, vector<4x256xf32>
    %cst_47 = arith.constant dense<0.000000e+00> : vector<256xf32>
    %64 = vector.multi_reduction <add>, %55, %cst_47 [0] : vector<28x256xf32> to vector<256xf32>
    %65 = vector.shape_cast %64 : vector<256xf32> to vector<1x256xf32>
    %cst_48 = arith.constant 2.800000e+01 : f32
    %66 = vector.broadcast %cst_48 : f32 to vector<1x256xf32>
    %67 = arith.divf %65, %66 : vector<1x256xf32>
    %68 = vector.broadcast %67 : vector<1x256xf32> to vector<28x256xf32>
    %69 = arith.subf %55, %68 : vector<28x256xf32>
    %70 = arith.mulf %69, %69 : vector<28x256xf32>
    %cst_49 = arith.constant dense<0.000000e+00> : vector<256xf32>
    %71 = vector.multi_reduction <add>, %70, %cst_49 [0] : vector<28x256xf32> to vector<256xf32>
    %72 = vector.shape_cast %71 : vector<256xf32> to vector<1x256xf32>
    %cst_50 = arith.constant 2.800000e+01 : f32
    %73 = vector.broadcast %cst_50 : f32 to vector<1x256xf32>
    %74 = arith.divf %72, %73 : vector<1x256xf32>
    %cst_51 = arith.constant 9.99999974E-6 : f32
    %75 = vector.broadcast %cst_51 : f32 to vector<1x256xf32>
    %76 = arith.addf %74, %75 : vector<1x256xf32>
    %77 = math.rsqrt %76 : vector<1x256xf32>
    %78 = vector.broadcast %77 : vector<1x256xf32> to vector<28x256xf32>
    %79 = arith.mulf %69, %78 : vector<28x256xf32>
    %80 = vector.broadcast %56 : vector<28x1xf32> to vector<28x256xf32>
    %81 = arith.mulf %79, %80 : vector<28x256xf32>
    %82 = vector.broadcast %57 : vector<28x1xf32> to vector<28x256xf32>
    %83 = arith.addf %81, %82 : vector<28x256xf32>
    %84 = arith.mulf %83, %83 : vector<28x256xf32>
    %cst_52 = arith.constant dense<0.000000e+00> : vector<28x4xf32>
    %85 = tpu.matmul %83, %62, %cst_52 {dimension_numbers = #tpu.dot_dimension_numbers<[1], [0], [0], [1], [0, 0, 1, 1], [], []>} : vector<28x256xf32>, vector<256x4xf32>, vector<28x4xf32> -> vector<28x4xf32>
    %cst_53 = arith.constant 1.562500e-02 : f32
    %86 = vector.broadcast %cst_53 : f32 to vector<28x4xf32>
    %87 = arith.mulf %85, %86 : vector<28x4xf32>
    %cst_54 = arith.constant dense<0.000000e+00> : vector<28x4xf32>
    %88 = tpu.matmul %84, %62, %cst_54 {dimension_numbers = #tpu.dot_dimension_numbers<[1], [0], [0], [1], [0, 0, 1, 1], [], []>} : vector<28x256xf32>, vector<256x4xf32>, vector<28x4xf32> -> vector<28x4xf32>
    %cst_55 = arith.constant 1.562500e-02 : f32
    %89 = vector.broadcast %cst_55 : f32 to vector<28x4xf32>
    %90 = arith.mulf %88, %89 : vector<28x4xf32>
    %91 = arith.mulf %87, %87 : vector<28x4xf32>
    %92 = arith.subf %90, %91 : vector<28x4xf32>
    %cst_56 = arith.constant 0.000000e+00 : f32
    %93 = vector.broadcast %cst_56 : f32 to vector<28x4xf32>
    %94 = arith.maximumf %92, %93 : vector<28x4xf32>
    %cst_57 = arith.constant 9.99999974E-6 : f32
    %95 = vector.broadcast %cst_57 : f32 to vector<28x4xf32>
    %96 = arith.addf %94, %95 : vector<28x4xf32>
    %97 = math.rsqrt %96 : vector<28x4xf32>
    %cst_58 = arith.constant dense<0.000000e+00> : vector<28x256xf32>
    %98 = tpu.matmul %87, %63, %cst_58 {dimension_numbers = #tpu.dot_dimension_numbers<[1], [0], [0], [1], [0, 0, 1, 1], [], []>} : vector<28x4xf32>, vector<4x256xf32>, vector<28x256xf32> -> vector<28x256xf32>
    %cst_59 = arith.constant dense<0.000000e+00> : vector<28x256xf32>
    %99 = tpu.matmul %97, %63, %cst_59 {dimension_numbers = #tpu.dot_dimension_numbers<[1], [0], [0], [1], [0, 0, 1, 1], [], []>} : vector<28x4xf32>, vector<4x256xf32>, vector<28x256xf32> -> vector<28x256xf32>
    %100 = arith.subf %83, %98 : vector<28x256xf32>
    %101 = arith.mulf %100, %99 : vector<28x256xf32>
    %102 = vector.broadcast %58 : vector<1x256xf32> to vector<28x256xf32>
    %103 = arith.mulf %101, %102 : vector<28x256xf32>
    %104 = vector.broadcast %59 : vector<1x256xf32> to vector<28x256xf32>
    %105 = arith.addf %103, %104 : vector<28x256xf32>
    %cst_60 = arith.constant dense<0.000000e+00> : vector<28x256xf32>
    %106 = tpu.matmul %60, %105, %cst_60 {dimension_numbers = #tpu.dot_dimension_numbers<[1], [0], [0], [1], [0, 0, 1, 1], [], []>} : vector<28x28xf32>, vector<28x256xf32>, vector<28x256xf32> -> vector<28x256xf32>
    %107 = vector.broadcast %61 : vector<28x1xf32> to vector<28x256xf32>
    %108 = arith.addf %106, %107 : vector<28x256xf32>
    %109 = arith.addf %108, %55 : vector<28x256xf32>
    %c0_61 = arith.constant 0 : index
    %c0_62 = arith.constant 0 : index
    %c0_63 = arith.constant 0 : index
    %110 = vector.load %arg18[%c0_61, %c0_62, %c0_63] : memref<1x28x256xf32, #tpu.memory_space<vmem>>, vector<1x28x256xf32>
    %111 = vector.shape_cast %110 : vector<1x28x256xf32> to vector<28x256xf32>
    %112 = vector.shape_cast %109 : vector<28x256xf32> to vector<1x28x256xf32>
    tpu.vector_store %arg18[%c0_61, %c0_62, %c0_63], %112 {strides = array<i32>} : memref<1x28x256xf32, #tpu.memory_space<vmem>>, vector<1x28x256xf32>,
    return
  }
  func.func @transform_0(%arg0: i32) -> (i32, i32, i32) {
    %c0_i32 = arith.constant 0 : i32
    %c0_i32_0 = arith.constant 0 : i32
    %c0_i32_1 = arith.constant 0 : i32
    return %arg0, %c0_i32, %c0_i32_0 : i32, i32, i32
  }
  func.func @transform_1(%arg0: i32) -> (i32, i32) {
    %c0_i32 = arith.constant 0 : i32
    %c0_i32_0 = arith.constant 0 : i32
    %c0_i32_1 = arith.constant 0 : i32
    return %c0_i32, %c0_i32_0 : i32, i32
  }
  func.func @transform_2(%arg0: i32) -> (i32, i32) {
    %c0_i32 = arith.constant 0 : i32
    %c0_i32_0 = arith.constant 0 : i32
    %c0_i32_1 = arith.constant 0 : i32
    return %c0_i32, %c0_i32_0 : i32, i32
  }
  func.func @transform_3(%arg0: i32) -> (i32, i32) {
    %c0_i32 = arith.constant 0 : i32
    %c0_i32_0 = arith.constant 0 : i32
    %c0_i32_1 = arith.constant 0 : i32
    return %c0_i32, %c0_i32_0 : i32, i32
  }
  func.func @transform_4(%arg0: i32) -> (i32, i32) {
    %c0_i32 = arith.constant 0 : i32
    %c0_i32_0 = arith.constant 0 : i32
    %c0_i32_1 = arith.constant 0 : i32
    return %c0_i32, %c0_i32_0 : i32, i32
  }
  func.func @transform_5(%arg0: i32) -> (i32, i32) {
    %c0_i32 = arith.constant 0 : i32
    %c0_i32_0 = arith.constant 0 : i32
    %c0_i32_1 = arith.constant 0 : i32
    return %c0_i32, %c0_i32_0 : i32, i32
  }
  func.func @transform_6(%arg0: i32) -> (i32, i32) {
    %c0_i32 = arith.constant 0 : i32
    %c0_i32_0 = arith.constant 0 : i32
    %c0_i32_1 = arith.constant 0 : i32
    return %c0_i32, %c0_i32_0 : i32, i32
  }
  func.func @transform_7(%arg0: i32) -> (i32, i32) {
    %c0_i32 = arith.constant 0 : i32
    %c0_i32_0 = arith.constant 0 : i32
    %c0_i32_1 = arith.constant 0 : i32
    return %c0_i32, %c0_i32_0 : i32, i32
  }
  func.func @transform_8(%arg0: i32) -> (i32, i32) {
    %c0_i32 = arith.constant 0 : i32
    %c0_i32_0 = arith.constant 0 : i32
    %c0_i32_1 = arith.constant 0 : i32
    return %c0_i32, %c0_i32_0 : i32, i32
  }
  func.func @transform_9(%arg0: i32) -> (i32, i32) {
    %c0_i32 = arith.constant 0 : i32
    %c0_i32_0 = arith.constant 0 : i32
    %c0_i32_1 = arith.constant 0 : i32
    return %c0_i32, %c0_i32_0 : i32, i32
  }
  func.func @transform_10(%arg0: i32) -> (i32, i32) {
    %c0_i32 = arith.constant 0 : i32
    %c0_i32_0 = arith.constant 0 : i32
    %c0_i32_1 = arith.constant 0 : i32
    return %c0_i32, %c0_i32_0 : i32, i32
  }
  func.func @transform_11(%arg0: i32) -> (i32, i32) {
    %c0_i32 = arith.constant 0 : i32
    %c0_i32_0 = arith.constant 0 : i32
    %c0_i32_1 = arith.constant 0 : i32
    return %c0_i32, %c0_i32_0 : i32, i32
  }
  func.func @transform_12(%arg0: i32) -> (i32, i32) {
    %c0_i32 = arith.constant 0 : i32
    %c0_i32_0 = arith.constant 0 : i32
    %c0_i32_1 = arith.constant 0 : i32
    return %c0_i32, %c0_i32_0 : i32, i32
  }
  func.func @transform_13(%arg0: i32) -> (i32, i32) {
    %c0_i32 = arith.constant 0 : i32
    %c0_i32_0 = arith.constant 0 : i32
    %c0_i32_1 = arith.constant 0 : i32
    return %c0_i32, %c0_i32_0 : i32, i32
  }
  func.func @transform_14(%arg0: i32) -> (i32, i32) {
    %c0_i32 = arith.constant 0 : i32
    %c0_i32_0 = arith.constant 0 : i32
    %c0_i32_1 = arith.constant 0 : i32
    return %c0_i32, %c0_i32_0 : i32, i32
  }
  func.func @transform_15(%arg0: i32) -> (i32, i32) {
    %c0_i32 = arith.constant 0 : i32
    %c0_i32_0 = arith.constant 0 : i32
    %c0_i32_1 = arith.constant 0 : i32
    return %c0_i32, %c0_i32_0 : i32, i32
  }
  func.func @transform_16(%arg0: i32) -> (i32, i32) {
    %c0_i32 = arith.constant 0 : i32
    %c0_i32_0 = arith.constant 0 : i32
    %c0_i32_1 = arith.constant 0 : i32
    return %c0_i32, %c0_i32_0 : i32, i32
  }
  func.func @transform_17(%arg0: i32) -> (i32, i32, i32) {
    %c0_i32 = arith.constant 0 : i32
    %c0_i32_0 = arith.constant 0 : i32
    %c0_i32_1 = arith.constant 0 : i32
    return %arg0, %c0_i32, %c0_i32_0 : i32, i32, i32
  }
}

</mosaic_0001>

<llo_original>
// kernel: a_call__.1
$region0: #{a_call__.1}
  #allocation0 [shape = 'u32[]', space=smem, size = 0x4, offset = 0x4, fixed_abs, tag = 'smem constant byte address 0x4 - core index']
  #allocation1 [shape = 'u32[144,128]{1,0:T(1,128)}', space=vmem, size = 0x12000, scoped, tag = 'internal scratch']
  %s0 = inlined_call_operand.vmem [shape: f32[2,28,256], index: 0, kind: input, shape index: {}]
  %s1 = inlined_call_operand.hbm [shape: f32[28,1], index: 1, kind: input, shape index: {}]
  %s2 = inlined_call_operand.hbm [shape: f32[28,1], index: 2, kind: input, shape index: {}]
  %s3 = inlined_call_operand.hbm [shape: f32[1,256], index: 3, kind: input, shape index: {}]
  %s4 = inlined_call_operand.vmem [shape: f32[1,256], index: 4, kind: input, shape index: {}]
  %s5 = inlined_call_operand.hbm [shape: f32[28,28], index: 5, kind: input, shape index: {}]
  %s6 = inlined_call_operand.hbm [shape: f32[28,1], index: 6, kind: input, shape index: {}]
  %s7 = inlined_call_operand.vmem [shape: f32[256,4], index: 7, kind: input, shape index: {}]
  %s8 = inlined_call_operand.hbm [shape: f32[4,256], index: 8, kind: input, shape index: {}]
  %s9 = inlined_call_operand.vmem [shape: f32[28,1], index: 9, kind: input, shape index: {}]
  %s10 = inlined_call_operand.vmem [shape: f32[28,1], index: 10, kind: input, shape index: {}]
  %s11 = inlined_call_operand.vmem [shape: f32[1,256], index: 11, kind: input, shape index: {}]
  %s12 = inlined_call_operand.vmem [shape: f32[1,256], index: 12, kind: input, shape index: {}]
  %s13 = inlined_call_operand.vmem [shape: f32[28,28], index: 13, kind: input, shape index: {}]
  %s14 = inlined_call_operand.vmem [shape: f32[28,1], index: 14, kind: input, shape index: {}]
  %s15 = inlined_call_operand.vmem [shape: f32[256,4], index: 15, kind: input, shape index: {}]
  %s16 = inlined_call_operand.vmem [shape: f32[4,256], index: 16, kind: input, shape index: {}]
  %s17 = inlined_call_operand.vmem [shape: f32[2,28,256], index: 17, kind: output, shape index: {}]
  %s18 = sld [smem:[#allocation0]]
  $region125: #{a_call__.1} parent=0
    _
  %s20 = ssub.s32 1, %s18
  %s21 = scalar_select 0, %s20, %s18
  $region1: #{a_call__.1} parent=0
    #allocation2 [shape = 'u8[16384]{0}', space=vmem, size = 0x4000, scoped, tag = 'input window, operand 1, single buffered']
    #allocation3 [shape = 's32[2]{0}', space=sflag, size = 0x8, scoped, tag = 'scoped memory for a_call__.1']
    #allocation4 [shape = 'u8[16384]{0}', space=vmem, size = 0x4000, scoped, tag = 'input window, operand 2, single buffered']
    #allocation5 [shape = 's32[1]{0}', space=sflag, size = 0x4, scoped, tag = 'scoped memory for a_call__.1']
    #allocation6 [shape = 'u8[1024]{0}', space=vmem, size = 0x400, scoped, tag = 'input window, operand 3, single buffered']
    #allocation7 [shape = 'u8[16384]{0}', space=vmem, size = 0x4000, scoped, tag = 'input window, operand 5, single buffered']
    #allocation8 [shape = 's32[1]{0}', space=sflag, size = 0x4, scoped, tag = 'scoped memory for a_call__.1']
    #allocation9 [shape = 'u8[16384]{0}', space=vmem, size = 0x4000, scoped, tag = 'input window, operand 6, single buffered']
    #allocation10 [shape = 'u8[4096]{0}', space=vmem, size = 0x1000, scoped, tag = 'input window, operand 8, single buffered']
    #allocation11 [shape = 's32[1]{0}', space=sflag, size = 0x4, scoped, tag = 'scoped memory for a_call__.1']
    %22 = vsyncpa [#allocation3], 0
    %23 = vsyncpa [#allocation5], 0
    %24 = vsyncpa [#allocation8], 0
    %25 = vsyncpa [#allocation11], 0
    loop: start=0, step=1, limit=4
    $region2: #{a_call__.1} parent=1 // loop_pre_header
      _
    $region3: #{a_call__.1} parent=1 // loop_header
      %s27 = sphi 0, %s31
      %p28 = scmp.ge.s32.totalorder %s27, 4
      %s37 = sphi 0, %s39
      %s40 = sphi 0, %s37
      %s41 = sphi 0, %s40
      %s57 = sphi 0, %s41
      %s61 = sphi 0, %s61
      %s63 = sphi 0, %s61
      %s64 = sphi 0, %s63
      %s78 = sphi 0, %s64
      %s82 = sphi 0, %s82
      %s84 = sphi 0, %s82
      %s85 = sphi 0, %s84
      %s99 = sphi 0, %s85
      %s103 = sphi 0, %s103
      %s105 = sphi 0, %s103
      %s106 = sphi 0, %s105
      %s120 = sphi 0, %s106
      %s124 = sphi 0, %s124
      %s126 = sphi 0, %s124
      %s127 = sphi 0, %s126
      %s141 = sphi 0, %s127
      %s145 = sphi 0, %s145
      %s147 = sphi 0, %s145
      %s148 = sphi 0, %s147
      %s162 = sphi 0, %s148
      %s166 = sphi 0, %s166
      %s168 = sphi 0, %s166
      %s169 = sphi 0, %s168
      %s183 = sphi 0, %s169
      %s187 = sphi 0, %s187
      %s189 = sphi 0, %s187
      %s190 = sphi 0, %s189
      %s204 = sphi 0, %s190
      %s208 = sphi 0, %s208
      %s210 = sphi 0, %s208
      %s211 = sphi 0, %s210
      %s225 = sphi 0, %s211
      %s229 = sphi 0, %s229
      %s231 = sphi 0, %s229
      %s232 = sphi 0, %s231
      %s246 = sphi 0, %s232
      %s250 = sphi 0, %s250
      %s252 = sphi 0, %s250
      %s253 = sphi 0, %s252
      %s267 = sphi 0, %s253
      %s271 = sphi 0, %s271
      %s273 = sphi 0, %s271
      %s274 = sphi 0, %s273
      %s288 = sphi 0, %s274
      %s292 = sphi 0, %s292
      %s294 = sphi 0, %s292
      %s295 = sphi 0, %s294
      %s309 = sphi 0, %s295
      %s313 = sphi 0, %s313
      %s315 = sphi 0, %s313
      %s316 = sphi 0, %s315
      %s330 = sphi 0, %s316
      %s334 = sphi 0, %s334
      %s336 = sphi 0, %s334
      %s337 = sphi 0, %s336
      %s351 = sphi 0, %s337
      %s355 = sphi 0, %s355
      %s357 = sphi 0, %s355
      %s358 = sphi 0, %s357
      %s372 = sphi 0, %s358
      %s376 = sphi 0, %s376
      %s378 = sphi 0, %s376
      %s379 = sphi 0, %s378
      %s393 = sphi 0, %s379
      %s399 = sphi 0, %s401
      %s402 = sphi 0, %s399
      %s403 = sphi 0, %s402
      %s419 = sphi 0, %s403
    $region4: #{a_call__.1} parent=1 // loop_header_branch
      %30 = sbr.rel (%p28) target = $region8
    $region5: #{a_call__.1} parent=1 // loop_body
      %s32 = ssub.s32 %s27, 1
      %s33 = ssub.s32 %s27, 2
      %s34 = sadd.s32 %s27, 1
      %s35 = ssub.s32 %s27, %s34
      %p36 = scmp.eq.s32.totalorder %s35, 0
      %s38 = sadd.s32 %s37, 1
      %s39 = scalar_select %p36, %s37, %s38
      %p42 = pneg %p36
      %p43 = scmp.eq.s32.totalorder %s27, 1
      %p44 = por %p42, %p43
      %p45 = scmp.ne.s32.totalorder %s37, %s40
      %p46 = scmp.eq.s32.totalorder %s27, 0
      %p47 = por %p45, %p46
      %p48 = scmp.ne.s32.totalorder %s37, %s40
      %p49 = scmp.eq.s32.totalorder %s32, 1
      %p50 = por %p48, %p49
      %p51 = scmp.ne.s32.totalorder %s40, %s41
      %p52 = scmp.eq.s32.totalorder %s32, 0
      %p53 = por %p51, %p52
      %p54 = scmp.ne.s32.totalorder %s40, %s41
      %p55 = scmp.eq.s32.totalorder %s33, 1
      %p56 = por %p54, %p55
      %p58 = scmp.ne.s32.totalorder %s41, %s57
      %p59 = scmp.eq.s32.totalorder %s33, 0
      %p60 = por %p58, %p59
      %s62 = sadd.s32 %s61, 1
      %p65 = scmp.eq.s32.totalorder %s27, 1
      %p66 = scmp.ne.s32.totalorder %s61, %s63
      %p67 = scmp.eq.s32.totalorder %s27, 0
      %p68 = por %p66, %p67
      %p69 = scmp.ne.s32.totalorder %s61, %s63
      %p70 = scmp.eq.s32.totalorder %s32, 1
      %p71 = por %p69, %p70
      %p72 = scmp.ne.s32.totalorder %s63, %s64
      %p73 = scmp.eq.s32.totalorder %s32, 0
      %p74 = por %p72, %p73
      %p75 = scmp.ne.s32.totalorder %s63, %s64
      %p76 = scmp.eq.s32.totalorder %s33, 1
      %p77 = por %p75, %p76
      %p79 = scmp.ne.s32.totalorder %s64, %s78
      %p80 = scmp.eq.s32.totalorder %s33, 0
      %p81 = por %p79, %p80
      %s83 = sadd.s32 %s82, 1
      %p86 = scmp.eq.s32.totalorder %s27, 1
      %p87 = scmp.ne.s32.totalorder %s82, %s84
      %p88 = scmp.eq.s32.totalorder %s27, 0
      %p89 = por %p87, %p88
      %p90 = scmp.ne.s32.totalorder %s82, %s84
      %p91 = scmp.eq.s32.totalorder %s32, 1
      %p92 = por %p90, %p91
      %p93 = scmp.ne.s32.totalorder %s84, %s85
      %p94 = scmp.eq.s32.totalorder %s32, 0
      %p95 = por %p93, %p94
      %p96 = scmp.ne.s32.totalorder %s84, %s85
      %p97 = scmp.eq.s32.totalorder %s33, 1
      %p98 = por %p96, %p97
      %p100 = scmp.ne.s32.totalorder %s85, %s99
      %p101 = scmp.eq.s32.totalorder %s33, 0
      %p102 = por %p100, %p101
      %s104 = sadd.s32 %s103, 1
      %p107 = scmp.eq.s32.totalorder %s27, 1
      %p108 = scmp.ne.s32.totalorder %s103, %s105
      %p109 = scmp.eq.s32.totalorder %s27, 0
      %p110 = por %p108, %p109
      %p111 = scmp.ne.s32.totalorder %s103, %s105
      %p112 = scmp.eq.s32.totalorder %s32, 1
      %p113 = por %p111, %p112
      %p114 = scmp.ne.s32.totalorder %s105, %s106
      %p115 = scmp.eq.s32.totalorder %s32, 0
      %p116 = por %p114, %p115
      %p117 = scmp.ne.s32.totalorder %s105, %s106
      %p118 = scmp.eq.s32.totalorder %s33, 1
      %p119 = por %p117, %p118
      %p121 = scmp.ne.s32.totalorder %s106, %s120
      %p122 = scmp.eq.s32.totalorder %s33, 0
      %p123 = por %p121, %p122
      %s125 = sadd.s32 %s124, 1
      %p128 = scmp.eq.s32.totalorder %s27, 1
      %p129 = scmp.ne.s32.totalorder %s124, %s126
      %p130 = scmp.eq.s32.totalorder %s27, 0
      %p131 = por %p129, %p130
      %p132 = scmp.ne.s32.totalorder %s124, %s126
      %p133 = scmp.eq.s32.totalorder %s32, 1
      %p134 = por %p132, %p133
      %p135 = scmp.ne.s32.totalorder %s126, %s127
      %p136 = scmp.eq.s32.totalorder %s32, 0
      %p137 = por %p135, %p136
      %p138 = scmp.ne.s32.totalorder %s126, %s127
      %p139 = scmp.eq.s32.totalorder %s33, 1
      %p140 = por %p138, %p139
      %p142 = scmp.ne.s32.totalorder %s127, %s141
      %p143 = scmp.eq.s32.totalorder %s33, 0
      %p144 = por %p142, %p143
      %s146 = sadd.s32 %s145, 1
      %p149 = scmp.eq.s32.totalorder %s27, 1
      %p150 = scmp.ne.s32.totalorder %s145, %s147
      %p151 = scmp.eq.s32.totalorder %s27, 0
      %p152 = por %p150, %p151
      %p153 = scmp.ne.s32.totalorder %s145, %s147
      %p154 = scmp.eq.s32.totalorder %s32, 1
      %p155 = por %p153, %p154
      %p156 = scmp.ne.s32.totalorder %s147, %s148
      %p157 = scmp.eq.s32.totalorder %s32, 0
      %p158 = por %p156, %p157
      %p159 = scmp.ne.s32.totalorder %s147, %s148
      %p160 = scmp.eq.s32.totalorder %s33, 1
      %p161 = por %p159, %p160
      %p163 = scmp.ne.s32.totalorder %s148, %s162
      %p164 = scmp.eq.s32.totalorder %s33, 0
      %p165 = por %p163, %p164
      %s167 = sadd.s32 %s166, 1
      %p170 = scmp.eq.s32.totalorder %s27, 1
      %p171 = scmp.ne.s32.totalorder %s166, %s168
      %p172 = scmp.eq.s32.totalorder %s27, 0
      %p173 = por %p171, %p172
      %p174 = scmp.ne.s32.totalorder %s166, %s168
      %p175 = scmp.eq.s32.totalorder %s32, 1
      %p176 = por %p174, %p175
      %p177 = scmp.ne.s32.totalorder %s168, %s169
      %p178 = scmp.eq.s32.totalorder %s32, 0
      %p179 = por %p177, %p178
      %p180 = scmp.ne.s32.totalorder %s168, %s169
      %p181 = scmp.eq.s32.totalorder %s33, 1
      %p182 = por %p180, %p181
      %p184 = scmp.ne.s32.totalorder %s169, %s183
      %p185 = scmp.eq.s32.totalorder %s33, 0
      %p186 = por %p184, %p185
      %s188 = sadd.s32 %s187, 1
      %p191 = scmp.eq.s32.totalorder %s27, 1
      %p192 = scmp.ne.s32.totalorder %s187, %s189
      %p193 = scmp.eq.s32.totalorder %s27, 0
      %p194 = por %p192, %p193
      %p195 = scmp.ne.s32.totalorder %s187, %s189
      %p196 = scmp.eq.s32.totalorder %s32, 1
      %p197 = por %p195, %p196
      %p198 = scmp.ne.s32.totalorder %s189, %s190
      %p199 = scmp.eq.s32.totalorder %s32, 0
      %p200 = por %p198, %p199
      %p201 = scmp.ne.s32.totalorder %s189, %s190
      %p202 = scmp.eq.s32.totalorder %s33, 1
      %p203 = por %p201, %p202
      %p205 = scmp.ne.s32.totalorder %s190, %s204
      %p206 = scmp.eq.s32.totalorder %s33, 0
      %p207 = por %p205, %p206
      %s209 = sadd.s32 %s208, 1
      %p212 = scmp.eq.s32.totalorder %s27, 1
      %p213 = scmp.ne.s32.totalorder %s208, %s210
      %p214 = scmp.eq.s32.totalorder %s27, 0
      %p215 = por %p213, %p214
      %p216 = scmp.ne.s32.totalorder %s208, %s210
      %p217 = scmp.eq.s32.totalorder %s32, 1
      %p218 = por %p216, %p217
      %p219 = scmp.ne.s32.totalorder %s210, %s211
      %p220 = scmp.eq.s32.totalorder %s32, 0
      %p221 = por %p219, %p220
      %p222 = scmp.ne.s32.totalorder %s210, %s211
      %p223 = scmp.eq.s32.totalorder %s33, 1
      %p224 = por %p222, %p223
      %p226 = scmp.ne.s32.totalorder %s211, %s225
      %p227 = scmp.eq.s32.totalorder %s33, 0
      %p228 = por %p226, %p227
      %s230 = sadd.s32 %s229, 1
      %p233 = scmp.eq.s32.totalorder %s27, 1
      %p234 = scmp.ne.s32.totalorder %s229, %s231
      %p235 = scmp.eq.s32.totalorder %s27, 0
      %p236 = por %p234, %p235
      %p237 = scmp.ne.s32.totalorder %s229, %s231
      %p238 = scmp.eq.s32.totalorder %s32, 1
      %p239 = por %p237, %p238
      %p240 = scmp.ne.s32.totalorder %s231, %s232
      %p241 = scmp.eq.s32.totalorder %s32, 0
      %p242 = por %p240, %p241
      %p243 = scmp.ne.s32.totalorder %s231, %s232
      %p244 = scmp.eq.s32.totalorder %s33, 1
      %p245 = por %p243, %p244
      %p247 = scmp.ne.s32.totalorder %s232, %s246
      %p248 = scmp.eq.s32.totalorder %s33, 0
      %p249 = por %p247, %p248
      %s251 = sadd.s32 %s250, 1
      %p254 = scmp.eq.s32.totalorder %s27, 1
      %p255 = scmp.ne.s32.totalorder %s250, %s252
      %p256 = scmp.eq.s32.totalorder %s27, 0
      %p257 = por %p255, %p256
      %p258 = scmp.ne.s32.totalorder %s250, %s252
      %p259 = scmp.eq.s32.totalorder %s32, 1
      %p260 = por %p258, %p259
      %p261 = scmp.ne.s32.totalorder %s252, %s253
      %p262 = scmp.eq.s32.totalorder %s32, 0
      %p263 = por %p261, %p262
      %p264 = scmp.ne.s32.totalorder %s252, %s253
      %p265 = scmp.eq.s32.totalorder %s33, 1
      %p266 = por %p264, %p265
      %p268 = scmp.ne.s32.totalorder %s253, %s267
      %p269 = scmp.eq.s32.totalorder %s33, 0
      %p270 = por %p268, %p269
      %s272 = sadd.s32 %s271, 1
      %p275 = scmp.eq.s32.totalorder %s27, 1
      %p276 = scmp.ne.s32.totalorder %s271, %s273
      %p277 = scmp.eq.s32.totalorder %s27, 0
      %p278 = por %p276, %p277
      %p279 = scmp.ne.s32.totalorder %s271, %s273
      %p280 = scmp.eq.s32.totalorder %s32, 1
      %p281 = por %p279, %p280
      %p282 = scmp.ne.s32.totalorder %s273, %s274
      %p283 = scmp.eq.s32.totalorder %s32, 0
      %p284 = por %p282, %p283
      %p285 = scmp.ne.s32.totalorder %s273, %s274
      %p286 = scmp.eq.s32.totalorder %s33, 1
      %p287 = por %p285, %p286
      %p289 = scmp.ne.s32.totalorder %s274, %s288
      %p290 = scmp.eq.s32.totalorder %s33, 0
      %p291 = por %p289, %p290
      %s293 = sadd.s32 %s292, 1
      %p296 = scmp.eq.s32.totalorder %s27, 1
      %p297 = scmp.ne.s32.totalorder %s292, %s294
      %p298 = scmp.eq.s32.totalorder %s27, 0
      %p299 = por %p297, %p298
      %p300 = scmp.ne.s32.totalorder %s292, %s294
      %p301 = scmp.eq.s32.totalorder %s32, 1
      %p302 = por %p300, %p301
      %p303 = scmp.ne.s32.totalorder %s294, %s295
      %p304 = scmp.eq.s32.totalorder %s32, 0
      %p305 = por %p303, %p304
      %p306 = scmp.ne.s32.totalorder %s294, %s295
      %p307 = scmp.eq.s32.totalorder %s33, 1
      %p308 = por %p306, %p307
      %p310 = scmp.ne.s32.totalorder %s295, %s309
      %p311 = scmp.eq.s32.totalorder %s33, 0
      %p312 = por %p310, %p311
      %s314 = sadd.s32 %s313, 1
      %p317 = scmp.eq.s32.totalorder %s27, 1
      %p318 = scmp.ne.s32.totalorder %s313, %s315
      %p319 = scmp.eq.s32.totalorder %s27, 0
      %p320 = por %p318, %p319
      %p321 = scmp.ne.s32.totalorder %s313, %s315
      %p322 = scmp.eq.s32.totalorder %s32, 1
      %p323 = por %p321, %p322
      %p324 = scmp.ne.s32.totalorder %s315, %s316
      %p325 = scmp.eq.s32.totalorder %s32, 0
      %p326 = por %p324, %p325
      %p327 = scmp.ne.s32.totalorder %s315, %s316
      %p328 = scmp.eq.s32.totalorder %s33, 1
      %p329 = por %p327, %p328
      %p331 = scmp.ne.s32.totalorder %s316, %s330
      %p332 = scmp.eq.s32.totalorder %s33, 0
      %p333 = por %p331, %p332
      %s335 = sadd.s32 %s334, 1
      %p338 = scmp.eq.s32.totalorder %s27, 1
      %p339 = scmp.ne.s32.totalorder %s334, %s336
      %p340 = scmp.eq.s32.totalorder %s27, 0
      %p341 = por %p339, %p340
      %p342 = scmp.ne.s32.totalorder %s334, %s336
      %p343 = scmp.eq.s32.totalorder %s32, 1
      %p344 = por %p342, %p343
      %p345 = scmp.ne.s32.totalorder %s336, %s337
      %p346 = scmp.eq.s32.totalorder %s32, 0
      %p347 = por %p345, %p346
      %p348 = scmp.ne.s32.totalorder %s336, %s337
      %p349 = scmp.eq.s32.totalorder %s33, 1
      %p350 = por %p348, %p349
      %p352 = scmp.ne.s32.totalorder %s337, %s351
      %p353 = scmp.eq.s32.totalorder %s33, 0
      %p354 = por %p352, %p353
      %s356 = sadd.s32 %s355, 1
      %p359 = scmp.eq.s32.totalorder %s27, 1
      %p360 = scmp.ne.s32.totalorder %s355, %s357
      %p361 = scmp.eq.s32.totalorder %s27, 0
      %p362 = por %p360, %p361
      %p363 = scmp.ne.s32.totalorder %s355, %s357
      %p364 = scmp.eq.s32.totalorder %s32, 1
      %p365 = por %p363, %p364
      %p366 = scmp.ne.s32.totalorder %s357, %s358
      %p367 = scmp.eq.s32.totalorder %s32, 0
      %p368 = por %p366, %p367
      %p369 = scmp.ne.s32.totalorder %s357, %s358
      %p370 = scmp.eq.s32.totalorder %s33, 1
      %p371 = por %p369, %p370
      %p373 = scmp.ne.s32.totalorder %s358, %s372
      %p374 = scmp.eq.s32.totalorder %s33, 0
      %p375 = por %p373, %p374
      %s377 = sadd.s32 %s376, 1
      %p380 = scmp.eq.s32.totalorder %s27, 1
      %p381 = scmp.ne.s32.totalorder %s376, %s378
      %p382 = scmp.eq.s32.totalorder %s27, 0
      %p383 = por %p381, %p382
      %p384 = scmp.ne.s32.totalorder %s376, %s378
      %p385 = scmp.eq.s32.totalorder %s32, 1
      %p386 = por %p384, %p385
      %p387 = scmp.ne.s32.totalorder %s378, %s379
      %p388 = scmp.eq.s32.totalorder %s32, 0
      %p389 = por %p387, %p388
      %p390 = scmp.ne.s32.totalorder %s378, %s379
      %p391 = scmp.eq.s32.totalorder %s33, 1
      %p392 = por %p390, %p391
      %p394 = scmp.ne.s32.totalorder %s379, %s393
      %p395 = scmp.eq.s32.totalorder %s33, 0
      %p396 = por %p394, %p395
      %s397 = ssub.s32 %s27, %s34
      %p398 = scmp.eq.s32.totalorder %s397, 0
      %s400 = sadd.s32 %s399, 1
      %s401 = scalar_select %p398, %s399, %s400
      %p404 = pneg %p398
      %p405 = scmp.eq.s32.totalorder %s27, 1
      %p406 = por %p404, %p405
      %p407 = scmp.ne.s32.totalorder %s399, %s402
      %p408 = scmp.eq.s32.totalorder %s27, 0
      %p409 = por %p407, %p408
      %p410 = scmp.ne.s32.totalorder %s399, %s402
      %p411 = scmp.eq.s32.totalorder %s32, 1
      %p412 = por %p410, %p411
      %p413 = scmp.ne.s32.totalorder %s402, %s403
      %p414 = scmp.eq.s32.totalorder %s32, 0
      %p415 = por %p413, %p414
      %p416 = scmp.ne.s32.totalorder %s402, %s403
      %p417 = scmp.eq.s32.totalorder %s33, 1
      %p418 = por %p416, %p417
      %p420 = scmp.ne.s32.totalorder %s403, %s419
      %p421 = scmp.eq.s32.totalorder %s33, 0
      %p422 = por %p420, %p421
      %p423 = scmp.le.s32.totalorder 1, %s27
      %p424 = scmp.lt.s32.totalorder %s27, 3
      %p425 = pnand %p423, %p424
      %p426 = pneg %p425
      // Predicated region
      $region9: #{a_call__.1} parent=5 // pred_check
        _
      $region10: #{a_call__.1} parent=5 // pred_check_branch
        %428 = sbr.rel (%p425) target = $region12
      $region11: #{a_call__.1} parent=5 // pred_region
        %s429 = ssub.s32 %s27, 1
        // Predicated region
        $region13: #{a_call__.1} parent=11 // pred_check
          %p430 = pneg %p74
        $region14: #{a_call__.1} parent=11 // pred_check_branch
          %432 = sbr.rel (%p430) target = $region16
        $region15: #{a_call__.1} parent=11 // pred_region
          %s434 = ssub.s32 512, 512
          %435 = vsyncadd [#allocation3], %s434
          %s436 = sshll.u32 [#allocation2], 4
          %s437 = int_to_ptr.vmem [resolvable:$true] %s436
          %442 = dma.hbm_to_vmem [thread:$0]  %s1, 512, %s437, [#allocation3], 128, 128, 8
        $region16: #{a_call__.1} parent=11 // pred_fallthru
          _
        // Predicated region
        $region17: #{a_call__.1} parent=11 // pred_check
          %p443 = pneg %p95
        $region18: #{a_call__.1} parent=11 // pred_check_branch
          %445 = sbr.rel (%p443) target = $region20
        $region19: #{a_call__.1} parent=11 // pred_region
          %s447 = ssub.s32 512, 512
          %448 = vsyncadd [#allocation5], %s447
          %s449 = sshll.u32 [#allocation4], 4
          %s450 = int_to_ptr.vmem [resolvable:$true] %s449
          %455 = dma.hbm_to_vmem [thread:$0]  %s2, 512, %s450, [#allocation5], 128, 128, 8
        $region20: #{a_call__.1} parent=11 // pred_fallthru
          _
        // Predicated region
        $region21: #{a_call__.1} parent=11 // pred_check
          %p456 = pneg %p116
        $region22: #{a_call__.1} parent=11 // pred_check_branch
          %458 = sbr.rel (%p456) target = $region24
        $region23: #{a_call__.1} parent=11 // pred_region
          %s460 = ssub.s32 32, 32
          %461 = vsyncadd [#allocation5], %s460
          %s463 = sshll.u32 [#allocation6], 4
          %s464 = int_to_ptr.vmem [resolvable:$true] %s463
          %466 = dma.hbm_to_vmem [thread:$0]  %s3, 32, %s464, [#allocation5]
        $region24: #{a_call__.1} parent=11 // pred_fallthru
          _
        // Predicated region
        $region25: #{a_call__.1} parent=11 // pred_check
          %p467 = pneg %p137
        $region26: #{a_call__.1} parent=11 // pred_check_branch
          %469 = sbr.rel (%p467) target = $region28
        $region27: #{a_call__.1} parent=11 // pred_region
          _
        $region28: #{a_call__.1} parent=11 // pred_fallthru
          _
        // Predicated region
        $region29: #{a_call__.1} parent=11 // pred_check
          %p470 = pneg %p158
        $region30: #{a_call__.1} parent=11 // pred_check_branch
          %472 = sbr.rel (%p470) target = $region32
        $region31: #{a_call__.1} parent=11 // pred_region
          %s474 = ssub.s32 512, 512
          %475 = vsyncadd [#allocation8], %s474
          %s476 = sshll.u32 [#allocation7], 4
          %s477 = int_to_ptr.vmem [resolvable:$true] %s476
          %482 = dma.hbm_to_vmem [thread:$0]  %s5, 512, %s477, [#allocation8], 128, 128, 8
        $region32: #{a_call__.1} parent=11 // pred_fallthru
          _
        // Predicated region
        $region33: #{a_call__.1} parent=11 // pred_check
          %p483 = pneg %p179
        $region34: #{a_call__.1} parent=11 // pred_check_branch
          %485 = sbr.rel (%p483) target = $region36
        $region35: #{a_call__.1} parent=11 // pred_region
          %s487 = ssub.s32 512, 512
          %488 = vsyncadd [#allocation8], %s487
          %s489 = sshll.u32 [#allocation9], 4
          %s490 = int_to_ptr.vmem [resolvable:$true] %s489
          %495 = dma.hbm_to_vmem [thread:$0]  %s6, 512, %s490, [#allocation8], 128, 128, 8
        $region36: #{a_call__.1} parent=11 // pred_fallthru
          _
        // Predicated region
        $region37: #{a_call__.1} parent=11 // pred_check
          %p496 = pneg %p200
        $region38: #{a_call__.1} parent=11 // pred_check_branch
          %498 = sbr.rel (%p496) target = $region40
        $region39: #{a_call__.1} parent=11 // pred_region
          _
        $region40: #{a_call__.1} parent=11 // pred_fallthru
          _
        // Predicated region
        $region41: #{a_call__.1} parent=11 // pred_check
          %p499 = pneg %p221
        $region42: #{a_call__.1} parent=11 // pred_check_branch
          %501 = sbr.rel (%p499) target = $region44
        $region43: #{a_call__.1} parent=11 // pred_region
          %s503 = ssub.s32 128, 128
          %504 = vsyncadd [#allocation11], %s503
          %s506 = sshll.u32 [#allocation10], 4
          %s507 = int_to_ptr.vmem [resolvable:$true] %s506
          %509 = dma.hbm_to_vmem [thread:$0]  %s8, 128, %s507, [#allocation11]
        $region44: #{a_call__.1} parent=11 // pred_fallthru
          _
        // Predicated region
        $region45: #{a_call__.1} parent=11 // pred_check
          %p510 = pneg %p242
        $region46: #{a_call__.1} parent=11 // pred_check_branch
          %512 = sbr.rel (%p510) target = $region48
        $region47: #{a_call__.1} parent=11 // pred_region
          _
        $region48: #{a_call__.1} parent=11 // pred_fallthru
          _
        // Predicated region
        $region49: #{a_call__.1} parent=11 // pred_check
          %p513 = pneg %p263
        $region50: #{a_call__.1} parent=11 // pred_check_branch
          %515 = sbr.rel (%p513) target = $region52
        $region51: #{a_call__.1} parent=11 // pred_region
          _
        $region52: #{a_call__.1} parent=11 // pred_fallthru
          _
        // Predicated region
        $region53: #{a_call__.1} parent=11 // pred_check
          %p516 = pneg %p284
        $region54: #{a_call__.1} parent=11 // pred_check_branch
          %518 = sbr.rel (%p516) target = $region56
        $region55: #{a_call__.1} parent=11 // pred_region
          _
        $region56: #{a_call__.1} parent=11 // pred_fallthru
          _
        // Predicated region
        $region57: #{a_call__.1} parent=11 // pred_check
          %p519 = pneg %p305
        $region58: #{a_call__.1} parent=11 // pred_check_branch
          %521 = sbr.rel (%p519) target = $region60
        $region59: #{a_call__.1} parent=11 // pred_region
          _
        $region60: #{a_call__.1} parent=11 // pred_fallthru
          _
        // Predicated region
        $region61: #{a_call__.1} parent=11 // pred_check
          %p522 = pneg %p326
        $region62: #{a_call__.1} parent=11 // pred_check_branch
          %524 = sbr.rel (%p522) target = $region64
        $region63: #{a_call__.1} parent=11 // pred_region
          _
        $region64: #{a_call__.1} parent=11 // pred_fallthru
          _
        // Predicated region
        $region65: #{a_call__.1} parent=11 // pred_check
          %p525 = pneg %p347
        $region66: #{a_call__.1} parent=11 // pred_check_branch
          %527 = sbr.rel (%p525) target = $region68
        $region67: #{a_call__.1} parent=11 // pred_region
          _
        $region68: #{a_call__.1} parent=11 // pred_fallthru
          _
        // Predicated region
        $region69: #{a_call__.1} parent=11 // pred_check
          %p528 = pneg %p368
        $region70: #{a_call__.1} parent=11 // pred_check_branch
          %530 = sbr.rel (%p528) target = $region72
        $region71: #{a_call__.1} parent=11 // pred_region
          _
        $region72: #{a_call__.1} parent=11 // pred_fallthru
          _
        // Predicated region
        $region73: #{a_call__.1} parent=11 // pred_check
          %p531 = pneg %p389
        $region74: #{a_call__.1} parent=11 // pred_check_branch
          %533 = sbr.rel (%p531) target = $region76
        $region75: #{a_call__.1} parent=11 // pred_region
          _
        $region76: #{a_call__.1} parent=11 // pred_fallthru
          _
      $region12: #{a_call__.1} parent=5 // pred_fallthru
        _
      %p534 = scmp.lt.s32.totalorder %s27, 2
      // Predicated region
      $region77: #{a_call__.1} parent=5 // pred_check
        %p535 = pneg %p534
      $region78: #{a_call__.1} parent=5 // pred_check_branch
        %537 = sbr.rel (%p535) target = $region80
      $region79: #{a_call__.1} parent=5 // pred_region
        // Predicated region
        $region81: #{a_call__.1} parent=79 // pred_check
          %p538 = pneg %p47
        $region82: #{a_call__.1} parent=79 // pred_check_branch
          %540 = sbr.rel (%p538) target = $region84
        $region83: #{a_call__.1} parent=79 // pred_region
          %p541 = scmp.lt.s32.totalorder %s27, 1
          %s542 = scalar_select %p541, %s27, 1
          %s543 = smul.addr %s542, 8
          %s544 = smul.addr %s543, 8
          %s545 = scalar_lea.vmem %s0, %s544
        $region84: #{a_call__.1} parent=79 // pred_fallthru
          _
      $region80: #{a_call__.1} parent=5 // pred_fallthru
        _
      %p546 = scmp.le.s32.totalorder 1, %s27
      %p547 = scmp.lt.s32.totalorder %s27, 3
      %p548 = pnand %p546, %p547
      %p549 = pneg %p548
      // Predicated region
      $region85: #{a_call__.1} parent=5 // pred_check
        _
      $region86: #{a_call__.1} parent=5 // pred_check_branch
        %551 = sbr.rel (%p548) target = $region88
      $region87: #{a_call__.1} parent=5 // pred_region
        %s552 = ssub.s32 %s27, 1
        // Predicated region
        $region89: #{a_call__.1} parent=87 // pred_check
          %p553 = pneg %p74
        $region90: #{a_call__.1} parent=87 // pred_check_branch
          %555 = sbr.rel (%p553) target = $region92
        $region91: #{a_call__.1} parent=87 // pred_region
          %556 = dma.done [#allocation3], 512
        $region92: #{a_call__.1} parent=87 // pred_fallthru
          _
        // Predicated region
        $region93: #{a_call__.1} parent=87 // pred_check
          %p557 = pneg %p95
        $region94: #{a_call__.1} parent=87 // pred_check_branch
          %559 = sbr.rel (%p557) target = $region96
        $region95: #{a_call__.1} parent=87 // pred_region
          %560 = dma.done [#allocation5], 512
        $region96: #{a_call__.1} parent=87 // pred_fallthru
          _
        // Predicated region
        $region97: #{a_call__.1} parent=87 // pred_check
          %p561 = pneg %p116
        $region98: #{a_call__.1} parent=87 // pred_check_branch
          %563 = sbr.rel (%p561) target = $region100
        $region99: #{a_call__.1} parent=87 // pred_region
          %564 = dma.done [#allocation5], 32
        $region100: #{a_call__.1} parent=87 // pred_fallthru
          _
        // Predicated region
        $region101: #{a_call__.1} parent=87 // pred_check
          %p565 = pneg %p158
        $region102: #{a_call__.1} parent=87 // pred_check_branch
          %567 = sbr.rel (%p565) target = $region104
        $region103: #{a_call__.1} parent=87 // pred_region
          %568 = dma.done [#allocation8], 512
        $region104: #{a_call__.1} parent=87 // pred_fallthru
          _
        // Predicated region
        $region105: #{a_call__.1} parent=87 // pred_check
          %p569 = pneg %p179
        $region106: #{a_call__.1} parent=87 // pred_check_branch
          %571 = sbr.rel (%p569) target = $region108
        $region107: #{a_call__.1} parent=87 // pred_region
          %572 = dma.done [#allocation8], 512
        $region108: #{a_call__.1} parent=87 // pred_fallthru
          _
        // Predicated region
        $region109: #{a_call__.1} parent=87 // pred_check
          %p573 = pneg %p221
        $region110: #{a_call__.1} parent=87 // pred_check_branch
          %575 = sbr.rel (%p573) target = $region112
        $region111: #{a_call__.1} parent=87 // pred_region
          %576 = dma.done [#allocation11], 128
        $region112: #{a_call__.1} parent=87 // pred_fallthru
          _
        %p577 = scmp.lt.s32.totalorder %s32, 1
        %s578 = scalar_select %p577, %s32, 1
        %s579 = smul.addr %s578, 8
        %s580 = smul.addr %s579, 8
        %s581 = scalar_lea.vmem %s0, %s580
        %p582 = pneg %p53
        %p583 = pneg %p50
        %p584 = pneg %p74
        %p585 = pneg %p71
        %p586 = pneg %p95
        %p587 = pneg %p92
        %p588 = pneg %p116
        %p589 = pneg %p113
        %p590 = pneg %p137
        %p591 = pneg %p134
        %p592 = pneg %p158
        %p593 = pneg %p155
        %p594 = pneg %p179
        %p595 = pneg %p176
        %p596 = pneg %p200
        %p597 = pneg %p197
        %p598 = pneg %p221
        %p599 = pneg %p218
        %p600 = pneg %p242
        %p601 = pneg %p239
        %p602 = pneg %p263
        %p603 = pneg %p260
        %p604 = pneg %p284
        %p605 = pneg %p281
        %p606 = pneg %p305
        %p607 = pneg %p302
        %p608 = pneg %p326
        %p609 = pneg %p323
        %p610 = pneg %p347
        %p611 = pneg %p344
        %p612 = pneg %p368
        %p613 = pneg %p365
        %p614 = pneg %p389
        %p615 = pneg %p386
        %p616 = pneg %p415
        %p617 = pneg %p412
        %p618 = scmp.lt.s32.totalorder %s32, 1
        %s619 = scalar_select %p618, %s32, 1
        %s620 = smul.addr %s619, 8
        %s621 = smul.addr %s620, 8
        %s622 = scalar_lea.vmem %s17, %s621
        %p623 = scmp.lt.s32.totalorder %s32, 1
        %s624 = scalar_select %p623, %s32, 1
        %s625 = smul.addr %s624, 8
        %s626 = smul.addr %s625, 8
        %s627 = scalar_lea.vmem %s0, %s626
        %p628 = scmp.lt.s32.totalorder %s32, 1
        %s629 = scalar_select %p628, %s32, 1
        %s630 = smul.addr %s629, 8
        %s631 = smul.addr %s630, 8
        %s632 = scalar_lea.vmem %s17, %s631
        %v633 = vld [vmem:[%s627] sm:$0xff]
        %v634 = vld [vmem:[%s627 + $0x8] sm:$0xff]
        %v635 = vld [vmem:[%s627 + $0x10] sm:$0xff]
        %v636 = vld [vmem:[%s627 + $0x18] sm:$0xff]
        %v637 = vld [vmem:[%s627 + $0x20] sm:$0xff]
        %v638 = vld [vmem:[%s627 + $0x28] sm:$0xff]
        %v639 = vld [vmem:[%s627 + $0x30] sm:$0xf]
        %v640 = vld [vmem:[%s627 + $0x38] sm:$0xf]
        %v641 = vld [vmem:[#allocation2] sm:$0xff]
        %v642 = vld [vmem:[#allocation2 + $0x8] sm:$0xff]
        %v643 = vld [vmem:[#allocation2 + $0x10] sm:$0xff]
        %v644 = vld [vmem:[#allocation2 + $0x18] sm:$0xf]
        %v645 = vld [vmem:[#allocation4] sm:$0xff]
        %v646 = vld [vmem:[#allocation4 + $0x8] sm:$0xff]
        %v647 = vld [vmem:[#allocation4 + $0x10] sm:$0xff]
        %v648 = vld [vmem:[#allocation4 + $0x18] sm:$0xf]
        %v649 = vld [vmem:[#allocation6] sm:$0x3]
        %v650 = vld [vmem:[%s4] sm:$0x3]
        %v651 = vld [vmem:[#allocation7] sm:$0xff]
        %v652 = vld [vmem:[#allocation7 + $0x8] sm:$0xff]
        %v653 = vld [vmem:[#allocation7 + $0x10] sm:$0xff]
        %v654 = vld [vmem:[#allocation7 + $0x18] sm:$0xf]
        %v655 = vld [vmem:[#allocation9] sm:$0xff]
        %v656 = vld [vmem:[#allocation9 + $0x8] sm:$0xff]
        %v657 = vld [vmem:[#allocation9 + $0x10] sm:$0xff]
        %v658 = vld [vmem:[#allocation9 + $0x18] sm:$0xf]
        %v659 = vld [vmem:[%s7] sm:$0xff]
        %v660 = vld [vmem:[%s7 + $0x8] sm:$0xff]
        %v661 = vld [vmem:[%s7 + $0x10] sm:$0xff]
        %v662 = vld [vmem:[%s7 + $0x18] sm:$0xff]
        %v663 = vld [vmem:[%s7 + $0x20] sm:$0xff]
        %v664 = vld [vmem:[%s7 + $0x28] sm:$0xff]
        %v665 = vld [vmem:[%s7 + $0x30] sm:$0xff]
        %v666 = vld [vmem:[%s7 + $0x38] sm:$0xff]
        %v667 = vld [vmem:[%s7 + $0x40] sm:$0xff]
        %v668 = vld [vmem:[%s7 + $0x48] sm:$0xff]
        %v669 = vld [vmem:[%s7 + $0x50] sm:$0xff]
        %v670 = vld [vmem:[%s7 + $0x58] sm:$0xff]
        %v671 = vld [vmem:[%s7 + $0x60] sm:$0xff]
        %v672 = vld [vmem:[%s7 + $0x68] sm:$0xff]
        %v673 = vld [vmem:[%s7 + $0x70] sm:$0xff]
        %v674 = vld [vmem:[%s7 + $0x78] sm:$0xff]
        %v675 = vld [vmem:[%s7 + $0x80] sm:$0xff]
        %v676 = vld [vmem:[%s7 + $0x88] sm:$0xff]
        %v677 = vld [vmem:[%s7 + $0x90] sm:$0xff]
        %v678 = vld [vmem:[%s7 + $0x98] sm:$0xff]
        %v679 = vld [vmem:[%s7 + $0xa0] sm:$0xff]
        %v680 = vld [vmem:[%s7 + $0xa8] sm:$0xff]
        %v681 = vld [vmem:[%s7 + $0xb0] sm:$0xff]
        %v682 = vld [vmem:[%s7 + $0xb8] sm:$0xff]
        %v683 = vld [vmem:[%s7 + $0xc0] sm:$0xff]
        %v684 = vld [vmem:[%s7 + $0xc8] sm:$0xff]
        %v685 = vld [vmem:[%s7 + $0xd0] sm:$0xff]
        %v686 = vld [vmem:[%s7 + $0xd8] sm:$0xff]
        %v687 = vld [vmem:[%s7 + $0xe0] sm:$0xff]
        %v688 = vld [vmem:[%s7 + $0xe8] sm:$0xff]
        %v689 = vld [vmem:[%s7 + $0xf0] sm:$0xff]
        %v690 = vld [vmem:[%s7 + $0xf8] sm:$0xff]
        %v691 = vld [vmem:[#allocation10] sm:$0xff]
        %v692 = vadd.f32 %v633, %v635
        %v693 = vadd.f32 %v692, %v637
        %vm694 = vcmask 1043456
        %v695 = vsel %vm694, %v639, 0.0
        %v696 = vadd.f32 %v693, %v695
        %v697 = vrot.slane %v696, 4
        %v698 = vadd.f32 %v696, %v697
        %v699 = vrot.slane %v698, 2
        %v700 = vadd.f32 %v698, %v699
        %v701 = vrot.slane %v700, 1
        %v702 = vadd.f32 %v700, %v701
        %v703 = vadd.f32 %v634, %v636
        %v704 = vadd.f32 %v703, %v638
        %v705 = vsel %vm694, %v640, 0.0
        %v706 = vadd.f32 %v704, %v705
        %v707 = vrot.slane %v706, 4
        %v708 = vadd.f32 %v706, %v707
        %v709 = vrot.slane %v708, 2
        %v710 = vadd.f32 %v708, %v709
        %v711 = vrot.slane %v710, 1
        %v712 = vadd.f32 %v710, %v711
        %v713 = vrcp.pop 28.0
        %v714 = vmul.f32 %v702, %v713
        %v715 = vmul.f32 %v712, %v713
        %v716 = vsub.f32 %v633, %v714
        %v717 = vsub.f32 %v634, %v715
        %v718 = vsub.f32 %v635, %v714
        %v719 = vsub.f32 %v636, %v715
        %v720 = vsub.f32 %v637, %v714
        %v721 = vsub.f32 %v638, %v715
        %v722 = vsub.f32 %v639, %v714
        %v723 = vsub.f32 %v640, %v715
        %v724 = vmul.f32 %v716, %v716
        %v725 = vmul.f32 %v717, %v717
        %v726 = vmul.f32 %v718, %v718
        %v727 = vmul.f32 %v719, %v719
        %v728 = vmul.f32 %v720, %v720
        %v729 = vmul.f32 %v721, %v721
        %v730 = vmul.f32 %v722, %v722
        %v731 = vmul.f32 %v723, %v723
        %v732 = vadd.f32 %v724, %v726
        %v733 = vadd.f32 %v732, %v728
        %v734 = vsel %vm694, %v730, 0.0
        %v735 = vadd.f32 %v733, %v734
        %v736 = vrot.slane %v735, 4
        %v737 = vadd.f32 %v735, %v736
        %v738 = vrot.slane %v737, 2
        %v739 = vadd.f32 %v737, %v738
        %v740 = vrot.slane %v739, 1
        %v741 = vadd.f32 %v739, %v740
        %v742 = vadd.f32 %v725, %v727
        %v743 = vadd.f32 %v742, %v729
        %v744 = vsel %vm694, %v731, 0.0
        %v745 = vadd.f32 %v743, %v744
        %v746 = vrot.slane %v745, 4
        %v747 = vadd.f32 %v745, %v746
        %v748 = vrot.slane %v747, 2
        %v749 = vadd.f32 %v747, %v748
        %v750 = vrot.slane %v749, 1
        %v751 = vadd.f32 %v749, %v750
        %v752 = vmul.f32 %v741, %v713
        %v753 = vmul.f32 %v751, %v713
        %v754 = vadd.f32 %v752, 1e-05
        %v755 = vadd.f32 %v753, 1e-05
        %v756 = vrsqrt.pop %v754
        %v757 = vrsqrt.pop %v755
        %v758 = vmul.f32 %v716, %v756
        %v759 = vmul.f32 %v717, %v757
        %v760 = vmul.f32 %v718, %v756
        %v761 = vmul.f32 %v719, %v757
        %v762 = vmul.f32 %v720, %v756
        %v763 = vmul.f32 %v721, %v757
        %v764 = vmul.f32 %v722, %v756
        %v765 = vmul.f32 %v723, %v757
        %767 = vset.pattern.permute.xlu0 0
        %768 = vperm.xlu0 %767, %v641
        %v769 = vpop.permute.xlu0 %768
        %772 = vset.pattern.permute.xlu0 0
        %773 = vperm.xlu0 %772, %v642
        %v774 = vpop.permute.xlu0 %773
        %777 = vset.pattern.permute.xlu0 0
        %778 = vperm.xlu0 %777, %v643
        %v779 = vpop.permute.xlu0 %778
        %782 = vset.pattern.permute.xlu0 0
        %783 = vperm.xlu0 %782, %v644
        %v784 = vpop.permute.xlu0 %783
        %v786 = vmul.f32 %v758, %v769
        %v787 = vmul.f32 %v759, %v769
        %v788 = vmul.f32 %v760, %v774
        %v789 = vmul.f32 %v761, %v774
        %v790 = vmul.f32 %v762, %v779
        %v791 = vmul.f32 %v763, %v779
        %v792 = vmul.f32 %v764, %v784
        %v793 = vmul.f32 %v765, %v784
        %795 = vset.pattern.permute.xlu0 0
        %796 = vperm.xlu0 %795, %v645
        %v797 = vpop.permute.xlu0 %796
        %800 = vset.pattern.permute.xlu0 0
        %801 = vperm.xlu0 %800, %v646
        %v802 = vpop.permute.xlu0 %801
        %805 = vset.pattern.permute.xlu0 0
        %806 = vperm.xlu0 %805, %v647
        %v807 = vpop.permute.xlu0 %806
        %810 = vset.pattern.permute.xlu0 0
        %811 = vperm.xlu0 %810, %v648
        %v812 = vpop.permute.xlu0 %811
        %v814 = vadd.f32 %v786, %v797
        %v815 = vadd.f32 %v787, %v797
        %v816 = vadd.f32 %v788, %v802
        %v817 = vadd.f32 %v789, %v802
        %v818 = vadd.f32 %v790, %v807
        %v819 = vadd.f32 %v791, %v807
        %v820 = vadd.f32 %v792, %v812
        %v821 = vadd.f32 %v793, %v812
        %v822 = vmul.f32 %v814, %v814
        %v823 = vmul.f32 %v815, %v815
        %v824 = vmul.f32 %v816, %v816
        %v825 = vmul.f32 %v817, %v817
        %v826 = vmul.f32 %v818, %v818
        %v827 = vmul.f32 %v819, %v819
        %v828 = vmul.f32 %v820, %v820
        %v829 = vmul.f32 %v821, %v821
        %830 = vmatprep.subr.mxu0 0.0
        %831 = vmatpush1.msra.mxu0 %v674
        %832 = vmatprep.subr.mxu0 0.0
        %833 = vmatpush1.msra.mxu0 %v673
        %834 = vmatprep.subr.mxu0 0.0
        %835 = vmatpush1.msra.mxu0 %v672
        %836 = vmatprep.subr.mxu0 0.0
        %837 = vmatpush1.msra.mxu0 %v671
        %838 = vmatprep.subr.mxu0 0.0
        %839 = vmatpush1.msra.mxu0 %v670
        %840 = vmatprep.subr.mxu0 0.0
        %841 = vmatpush1.msra.mxu0 %v669
        %842 = vmatprep.subr.mxu0 0.0
        %843 = vmatpush1.msra.mxu0 %v668
        %844 = vmatprep.subr.mxu0 0.0
        %845 = vmatpush1.msra.mxu0 %v667
        %846 = vmatprep.subr.mxu0 0.0
        %847 = vmatpush1.msra.mxu0 %v666
        %848 = vmatprep.subr.mxu0 0.0
        %849 = vmatpush1.msra.mxu0 %v665
        %850 = vmatprep.subr.mxu0 0.0
        %851 = vmatpush1.msra.mxu0 %v664
        %852 = vmatprep.subr.mxu0 0.0
        %853 = vmatpush1.msra.mxu0 %v663
        %854 = vmatprep.subr.mxu0 0.0
        %855 = vmatpush1.msra.mxu0 %v662
        %856 = vmatprep.subr.mxu0 0.0
        %857 = vmatpush1.msra.mxu0 %v661
        %858 = vmatprep.subr.mxu0 0.0
        %859 = vmatpush1.msra.mxu0 %v660
        %860 = vmatprep.subr.mxu0 0.0
        %861 = vmatpush1.msra.mxu0 %v659
        %862 = vmatprep.subr.mxu0 0.0
        %863 = vmatpush2.msra.mxu0 %v690
        %864 = vmatprep.subr.mxu0 0.0
        %865 = vmatpush2.msra.mxu0 %v689
        %866 = vmatprep.subr.mxu0 0.0
        %867 = vmatpush2.msra.mxu0 %v688
        %868 = vmatprep.subr.mxu0 0.0
        %869 = vmatpush2.msra.mxu0 %v687
        %870 = vmatprep.subr.mxu0 0.0
        %871 = vmatpush2.msra.mxu0 %v686
        %872 = vmatprep.subr.mxu0 0.0
        %873 = vmatpush2.msra.mxu0 %v685
        %874 = vmatprep.subr.mxu0 0.0
        %875 = vmatpush2.msra.mxu0 %v684
        %876 = vmatprep.subr.mxu0 0.0
        %877 = vmatpush2.msra.mxu0 %v683
        %878 = vmatprep.subr.mxu0 0.0
        %879 = vmatpush2.msra.mxu0 %v682
        %880 = vmatprep.subr.mxu0 0.0
        %881 = vmatpush2.msra.mxu0 %v681
        %882 = vmatprep.subr.mxu0 0.0
        %883 = vmatpush2.msra.mxu0 %v680
        %884 = vmatprep.subr.mxu0 0.0
        %885 = vmatpush2.msra.mxu0 %v679
        %886 = vmatprep.subr.mxu0 0.0
        %887 = vmatpush2.msra.mxu0 %v678
        %888 = vmatprep.subr.mxu0 0.0
        %889 = vmatpush2.msra.mxu0 %v677
        %890 = vmatprep.subr.mxu0 0.0
        %891 = vmatpush2.msra.mxu0 %v676
        %892 = vmatprep.subr.mxu0 0.0
        %893 = vmatpush2.msra.mxu0 %v675
        %894 = vmatprep.mubr.f32.mxu0 %v815
        %895 = vmatmul.mubr.f32.gmra.mxu0 %v814
        %v896 = vpop.f32.mrf.mxu0
        %v897 = vadd.f32 0.0, %v896
        %v898 = vpop.f32.mrf.mxu0
        %899 = vmatprep.mubr.f32.mxu0 %v817
        %900 = vmatmul.mubr.f32.gmra.mxu0 %v816
        %v901 = vpop.f32.mrf.mxu0
        %v902 = vadd.f32 0.0, %v901
        %v903 = vpop.f32.mrf.mxu0
        %904 = vmatprep.mubr.f32.mxu0 %v819
        %905 = vmatmul.mubr.f32.gmra.mxu0 %v818
        %v906 = vpop.f32.mrf.mxu0
        %v907 = vadd.f32 0.0, %v906
        %v908 = vpop.f32.mrf.mxu0
        %909 = vmatprep.mubr.f32.mxu0 %v821
        %910 = vmatmul.mubr.f32.gmra.mxu0 %v820
        %v911 = vpop.f32.mrf.mxu0
        %v912 = vadd.f32 0.0, %v911
        %v913 = vpop.f32.mrf.mxu0
        %914 = vdwg.mxu0
        %v915 = vmul.f32 %v897, 0.015625
        %v916 = vmul.f32 %v902, 0.015625
        %v917 = vmul.f32 %v907, 0.015625
        %v918 = vmul.f32 %v912, 0.015625
        %919 = vmatprep.subr.mxu0 0.0
        %920 = vmatpush1.msra.mxu0 %v674
        %921 = vmatprep.subr.mxu0 0.0
        %922 = vmatpush1.msra.mxu0 %v673
        %923 = vmatprep.subr.mxu0 0.0
        %924 = vmatpush1.msra.mxu0 %v672
        %925 = vmatprep.subr.mxu0 0.0
        %926 = vmatpush1.msra.mxu0 %v671
        %927 = vmatprep.subr.mxu0 0.0
        %928 = vmatpush1.msra.mxu0 %v670
        %929 = vmatprep.subr.mxu0 0.0
        %930 = vmatpush1.msra.mxu0 %v669
        %931 = vmatprep.subr.mxu0 0.0
        %932 = vmatpush1.msra.mxu0 %v668
        %933 = vmatprep.subr.mxu0 0.0
        %934 = vmatpush1.msra.mxu0 %v667
        %935 = vmatprep.subr.mxu0 0.0
        %936 = vmatpush1.msra.mxu0 %v666
        %937 = vmatprep.subr.mxu0 0.0
        %938 = vmatpush1.msra.mxu0 %v665
        %939 = vmatprep.subr.mxu0 0.0
        %940 = vmatpush1.msra.mxu0 %v664
        %941 = vmatprep.subr.mxu0 0.0
        %942 = vmatpush1.msra.mxu0 %v663
        %943 = vmatprep.subr.mxu0 0.0
        %944 = vmatpush1.msra.mxu0 %v662
        %945 = vmatprep.subr.mxu0 0.0
        %946 = vmatpush1.msra.mxu0 %v661
        %947 = vmatprep.subr.mxu0 0.0
        %948 = vmatpush1.msra.mxu0 %v660
        %949 = vmatprep.subr.mxu0 0.0
        %950 = vmatpush1.msra.mxu0 %v659
        %951 = vmatprep.subr.mxu0 0.0
        %952 = vmatpush2.msra.mxu0 %v690
        %953 = vmatprep.subr.mxu0 0.0
        %954 = vmatpush2.msra.mxu0 %v689
        %955 = vmatprep.subr.mxu0 0.0
        %956 = vmatpush2.msra.mxu0 %v688
        %957 = vmatprep.subr.mxu0 0.0
        %958 = vmatpush2.msra.mxu0 %v687
        %959 = vmatprep.subr.mxu0 0.0
        %960 = vmatpush2.msra.mxu0 %v686
        %961 = vmatprep.subr.mxu0 0.0
        %962 = vmatpush2.msra.mxu0 %v685
        %963 = vmatprep.subr.mxu0 0.0
        %964 = vmatpush2.msra.mxu0 %v684
        %965 = vmatprep.subr.mxu0 0.0
        %966 = vmatpush2.msra.mxu0 %v683
        %967 = vmatprep.subr.mxu0 0.0
        %968 = vmatpush2.msra.mxu0 %v682
        %969 = vmatprep.subr.mxu0 0.0
        %970 = vmatpush2.msra.mxu0 %v681
        %971 = vmatprep.subr.mxu0 0.0
        %972 = vmatpush2.msra.mxu0 %v680
        %973 = vmatprep.subr.mxu0 0.0
        %974 = vmatpush2.msra.mxu0 %v679
        %975 = vmatprep.subr.mxu0 0.0
        %976 = vmatpush2.msra.mxu0 %v678
        %977 = vmatprep.subr.mxu0 0.0
        %978 = vmatpush2.msra.mxu0 %v677
        %979 = vmatprep.subr.mxu0 0.0
        %980 = vmatpush2.msra.mxu0 %v676
        %981 = vmatprep.subr.mxu0 0.0
        %982 = vmatpush2.msra.mxu0 %v675
        %983 = vmatprep.mubr.f32.mxu0 %v823
        %984 = vmatmul.mubr.f32.gmra.mxu0 %v822
        %v985 = vpop.f32.mrf.mxu0
        %v986 = vadd.f32 0.0, %v985
        %v987 = vpop.f32.mrf.mxu0
        %988 = vmatprep.mubr.f32.mxu0 %v825
        %989 = vmatmul.mubr.f32.gmra.mxu0 %v824
        %v990 = vpop.f32.mrf.mxu0
        %v991 = vadd.f32 0.0, %v990
        %v992 = vpop.f32.mrf.mxu0
        %993 = vmatprep.mubr.f32.mxu0 %v827
        %994 = vmatmul.mubr.f32.gmra.mxu0 %v826
        %v995 = vpop.f32.mrf.mxu0
        %v996 = vadd.f32 0.0, %v995
        %v997 = vpop.f32.mrf.mxu0
        %998 = vmatprep.mubr.f32.mxu0 %v829
        %999 = vmatmul.mubr.f32.gmra.mxu0 %v828
        %v1000 = vpop.f32.mrf.mxu0
        %v1001 = vadd.f32 0.0, %v1000
        %v1002 = vpop.f32.mrf.mxu0
        %1003 = vdwg.mxu0
        %v1004 = vmul.f32 %v986, 0.015625
        %v1005 = vmul.f32 %v991, 0.015625
        %v1006 = vmul.f32 %v996, 0.015625
        %v1007 = vmul.f32 %v1001, 0.015625
        %v1008 = vmul.f32 %v915, %v915
        %v1009 = vmul.f32 %v916, %v916
        %v1010 = vmul.f32 %v917, %v917
        %v1011 = vmul.f32 %v918, %v918
        %v1012 = vsub.f32 %v1004, %v1008
        %v1013 = vsub.f32 %v1005, %v1009
        %v1014 = vsub.f32 %v1006, %v1010
        %v1015 = vsub.f32 %v1007, %v1011
        %v1016 = vmax.f32 %v1012, 0.0
        %v1017 = vmax.f32 %v1013, 0.0
        %v1018 = vmax.f32 %v1014, 0.0
        %v1019 = vmax.f32 %v1015, 0.0
        %v1020 = vadd.f32 %v1016, 1e-05
        %v1021 = vadd.f32 %v1017, 1e-05
        %v1022 = vadd.f32 %v1018, 1e-05
        %v1023 = vadd.f32 %v1019, 1e-05
        %v1024 = vrsqrt.pop %v1020
        %v1025 = vrsqrt.pop %v1021
        %v1026 = vrsqrt.pop %v1022
        %v1027 = vrsqrt.pop %v1023
        %v1029 = vcombine.high %v691, %v691
        %vm1030 = vcmask 31744
        %v1032 = vsel %vm1030, %v915, 0
        %v1035 = vsel %vm1030, %v916, 0
        %v1038 = vsel %vm1030, %v917, 0
        %v1041 = vsel %vm1030, %v918, 0
        %v1043 = vsel %vm694, %v691, 0
        %v1045 = vsel %vm694, %v1029, 0
        %1047 = vmatprep.subr.mxu0 0.0
        %1048 = vmatpush1.msra.mxu0 0.0
        %1049 = vmatprep.subr.mxu0 0.0
        %1050 = vmatpush1.msra.mxu0 0.0
        %1051 = vmatprep.subr.mxu0 0.0
        %1052 = vmatpush1.msra.mxu0 0.0
        %1053 = vmatprep.subr.mxu0 0.0
        %1054 = vmatpush1.msra.mxu0 0.0
        %1055 = vmatprep.subr.mxu0 0.0
        %1056 = vmatpush1.msra.mxu0 0.0
        %1057 = vmatprep.subr.mxu0 0.0
        %1058 = vmatpush1.msra.mxu0 0.0
        %1059 = vmatprep.subr.mxu0 0.0
        %1060 = vmatpush1.msra.mxu0 0.0
        %1061 = vmatprep.subr.mxu0 0.0
        %1062 = vmatpush1.msra.mxu0 0.0
        %1063 = vmatprep.subr.mxu0 0.0
        %1064 = vmatpush1.msra.mxu0 0.0
        %1065 = vmatprep.subr.mxu0 0.0
        %1066 = vmatpush1.msra.mxu0 0.0
        %1067 = vmatprep.subr.mxu0 0.0
        %1068 = vmatpush1.msra.mxu0 0.0
        %1069 = vmatprep.subr.mxu0 0.0
        %1070 = vmatpush1.msra.mxu0 0.0
        %1071 = vmatprep.subr.mxu0 0.0
        %1072 = vmatpush1.msra.mxu0 0.0
        %1073 = vmatprep.subr.mxu0 0.0
        %1074 = vmatpush1.msra.mxu0 0.0
        %1075 = vmatprep.subr.mxu0 0.0
        %1076 = vmatpush1.msra.mxu0 0.0
        %1077 = vmatprep.subr.mxu0 %v1045
        %1078 = vmatpush1.msra.mxu0 %v1043
        %1079 = vmatprep.subr.mxu0 0.0
        %1080 = vmatpush2.msra.mxu0 0.0
        %1081 = vmatprep.subr.mxu0 0.0
        %1082 = vmatpush2.msra.mxu0 0.0
        %1083 = vmatprep.subr.mxu0 0.0
        %1084 = vmatpush2.msra.mxu0 0.0
        %1085 = vmatprep.subr.mxu0 0.0
        %1086 = vmatpush2.msra.mxu0 0.0
        %1087 = vmatprep.subr.mxu0 0.0
        %1088 = vmatpush2.msra.mxu0 0.0
        %1089 = vmatprep.subr.mxu0 0.0
        %1090 = vmatpush2.msra.mxu0 0.0
        %1091 = vmatprep.subr.mxu0 0.0
        %1092 = vmatpush2.msra.mxu0 0.0
        %1093 = vmatprep.subr.mxu0 0.0
        %1094 = vmatpush2.msra.mxu0 0.0
        %1095 = vmatprep.subr.mxu0 0.0
        %1096 = vmatpush2.msra.mxu0 0.0
        %1097 = vmatprep.subr.mxu0 0.0
        %1098 = vmatpush2.msra.mxu0 0.0
        %1099 = vmatprep.subr.mxu0 0.0
        %1100 = vmatpush2.msra.mxu0 0.0
        %1101 = vmatprep.subr.mxu0 0.0
        %1102 = vmatpush2.msra.mxu0 0.0
        %1103 = vmatprep.subr.mxu0 0.0
        %1104 = vmatpush2.msra.mxu0 0.0
        %1105 = vmatprep.subr.mxu0 0.0
        %1106 = vmatpush2.msra.mxu0 0.0
        %1107 = vmatprep.subr.mxu0 0.0
        %1108 = vmatpush2.msra.mxu0 0.0
        %1109 = vmatprep.subr.mxu0 0.0
        %1110 = vmatpush2.msra.mxu0 0.0
        %1111 = vmatprep.mubr.f32.mxu0 0.0
        %1112 = vmatmul.mubr.f32.gmra.mxu0 %v1032
        %v1113 = vpop.f32.mrf.mxu0
        %v1114 = vadd.f32 0.0, %v1113
        %v1115 = vpop.f32.mrf.mxu0
        %v1116 = vadd.f32 0.0, %v1115
        %1117 = vmatprep.mubr.f32.mxu0 0.0
        %1118 = vmatmul.mubr.f32.gmra.mxu0 %v1035
        %v1119 = vpop.f32.mrf.mxu0
        %v1120 = vadd.f32 0.0, %v1119
        %v1121 = vpop.f32.mrf.mxu0
        %v1122 = vadd.f32 0.0, %v1121
        %1123 = vmatprep.mubr.f32.mxu0 0.0
        %1124 = vmatmul.mubr.f32.gmra.mxu0 %v1038
        %v1125 = vpop.f32.mrf.mxu0
        %v1126 = vadd.f32 0.0, %v1125
        %v1127 = vpop.f32.mrf.mxu0
        %v1128 = vadd.f32 0.0, %v1127
        %1129 = vmatprep.mubr.f32.mxu0 0.0
        %1130 = vmatmul.mubr.f32.gmra.mxu0 %v1041
        %v1131 = vpop.f32.mrf.mxu0
        %v1132 = vadd.f32 0.0, %v1131
        %v1133 = vpop.f32.mrf.mxu0
        %v1134 = vadd.f32 0.0, %v1133
        %1135 = vdwg.mxu0
        %v1137 = vsel %vm1030, %v1024, 0
        %v1140 = vsel %vm1030, %v1025, 0
        %v1143 = vsel %vm1030, %v1026, 0
        %v1146 = vsel %vm1030, %v1027, 0
        %1148 = vmatprep.subr.mxu0 0.0
        %1149 = vmatpush1.msra.mxu0 0.0
        %1150 = vmatprep.subr.mxu0 0.0
        %1151 = vmatpush1.msra.mxu0 0.0
        %1152 = vmatprep.subr.mxu0 0.0
        %1153 = vmatpush1.msra.mxu0 0.0
        %1154 = vmatprep.subr.mxu0 0.0
        %1155 = vmatpush1.msra.mxu0 0.0
        %1156 = vmatprep.subr.mxu0 0.0
        %1157 = vmatpush1.msra.mxu0 0.0
        %1158 = vmatprep.subr.mxu0 0.0
        %1159 = vmatpush1.msra.mxu0 0.0
        %1160 = vmatprep.subr.mxu0 0.0
        %1161 = vmatpush1.msra.mxu0 0.0
        %1162 = vmatprep.subr.mxu0 0.0
        %1163 = vmatpush1.msra.mxu0 0.0
        %1164 = vmatprep.subr.mxu0 0.0
        %1165 = vmatpush1.msra.mxu0 0.0
        %1166 = vmatprep.subr.mxu0 0.0
        %1167 = vmatpush1.msra.mxu0 0.0
        %1168 = vmatprep.subr.mxu0 0.0
        %1169 = vmatpush1.msra.mxu0 0.0
        %1170 = vmatprep.subr.mxu0 0.0
        %1171 = vmatpush1.msra.mxu0 0.0
        %1172 = vmatprep.subr.mxu0 0.0
        %1173 = vmatpush1.msra.mxu0 0.0
        %1174 = vmatprep.subr.mxu0 0.0
        %1175 = vmatpush1.msra.mxu0 0.0
        %1176 = vmatprep.subr.mxu0 0.0
        %1177 = vmatpush1.msra.mxu0 0.0
        %1178 = vmatprep.subr.mxu0 %v1045
        %1179 = vmatpush1.msra.mxu0 %v1043
        %1180 = vmatprep.subr.mxu0 0.0
        %1181 = vmatpush2.msra.mxu0 0.0
        %1182 = vmatprep.subr.mxu0 0.0
        %1183 = vmatpush2.msra.mxu0 0.0
        %1184 = vmatprep.subr.mxu0 0.0
        %1185 = vmatpush2.msra.mxu0 0.0
        %1186 = vmatprep.subr.mxu0 0.0
        %1187 = vmatpush2.msra.mxu0 0.0
        %1188 = vmatprep.subr.mxu0 0.0
        %1189 = vmatpush2.msra.mxu0 0.0
        %1190 = vmatprep.subr.mxu0 0.0
        %1191 = vmatpush2.msra.mxu0 0.0
        %1192 = vmatprep.subr.mxu0 0.0
        %1193 = vmatpush2.msra.mxu0 0.0
        %1194 = vmatprep.subr.mxu0 0.0
        %1195 = vmatpush2.msra.mxu0 0.0
        %1196 = vmatprep.subr.mxu0 0.0
        %1197 = vmatpush2.msra.mxu0 0.0
        %1198 = vmatprep.subr.mxu0 0.0
        %1199 = vmatpush2.msra.mxu0 0.0
        %1200 = vmatprep.subr.mxu0 0.0
        %1201 = vmatpush2.msra.mxu0 0.0
        %1202 = vmatprep.subr.mxu0 0.0
        %1203 = vmatpush2.msra.mxu0 0.0
        %1204 = vmatprep.subr.mxu0 0.0
        %1205 = vmatpush2.msra.mxu0 0.0
        %1206 = vmatprep.subr.mxu0 0.0
        %1207 = vmatpush2.msra.mxu0 0.0
        %1208 = vmatprep.subr.mxu0 0.0
        %1209 = vmatpush2.msra.mxu0 0.0
        %1210 = vmatprep.subr.mxu0 0.0
        %1211 = vmatpush2.msra.mxu0 0.0
        %1212 = vmatprep.mubr.f32.mxu0 0.0
        %1213 = vmatmul.mubr.f32.gmra.mxu0 %v1137
        %v1214 = vpop.f32.mrf.mxu0
        %v1215 = vadd.f32 0.0, %v1214
        %v1216 = vpop.f32.mrf.mxu0
        %v1217 = vadd.f32 0.0, %v1216
        %1218 = vmatprep.mubr.f32.mxu0 0.0
        %1219 = vmatmul.mubr.f32.gmra.mxu0 %v1140
        %v1220 = vpop.f32.mrf.mxu0
        %v1221 = vadd.f32 0.0, %v1220
        %v1222 = vpop.f32.mrf.mxu0
        %v1223 = vadd.f32 0.0, %v1222
        %1224 = vmatprep.mubr.f32.mxu0 0.0
        %1225 = vmatmul.mubr.f32.gmra.mxu0 %v1143
        %v1226 = vpop.f32.mrf.mxu0
        %v1227 = vadd.f32 0.0, %v1226
        %v1228 = vpop.f32.mrf.mxu0
        %v1229 = vadd.f32 0.0, %v1228
        %1230 = vmatprep.mubr.f32.mxu0 0.0
        %1231 = vmatmul.mubr.f32.gmra.mxu0 %v1146
        %v1232 = vpop.f32.mrf.mxu0
        %v1233 = vadd.f32 0.0, %v1232
        %v1234 = vpop.f32.mrf.mxu0
        %v1235 = vadd.f32 0.0, %v1234
        %1236 = vdwg.mxu0
        %v1237 = vsub.f32 %v814, %v1114
        %v1238 = vsub.f32 %v815, %v1116
        %v1239 = vsub.f32 %v816, %v1120
        %v1240 = vsub.f32 %v817, %v1122
        %v1241 = vsub.f32 %v818, %v1126
        %v1242 = vsub.f32 %v819, %v1128
        %v1243 = vsub.f32 %v820, %v1132
        %v1244 = vsub.f32 %v821, %v1134
        %v1245 = vmul.f32 %v1237, %v1215
        %v1246 = vmul.f32 %v1238, %v1217
        %v1247 = vmul.f32 %v1239, %v1221
        %v1248 = vmul.f32 %v1240, %v1223
        %v1249 = vmul.f32 %v1241, %v1227
        %v1250 = vmul.f32 %v1242, %v1229
        %v1251 = vmul.f32 %v1243, %v1233
        %v1252 = vmul.f32 %v1244, %v1235
        %v1254 = vlaneseq
        %v1255 = vshrl.u32 %v1254, 7
        %v1256 = vsub.s32 0, %v1255
        %v1257 = vrot.slane %v649, %v1256
        %v1258 = vlaneseq
        %v1259 = vshrl.u32 %v1258, 7
        %v1260 = vsub.s32 1, %v1259
        %v1261 = vrot.slane %v649, %v1260
        %v1264 = vmul.f32 %v1245, %v1257
        %v1265 = vmul.f32 %v1246, %v1261
        %v1266 = vmul.f32 %v1247, %v1257
        %v1267 = vmul.f32 %v1248, %v1261
        %v1268 = vmul.f32 %v1249, %v1257
        %v1269 = vmul.f32 %v1250, %v1261
        %v1270 = vmul.f32 %v1251, %v1257
        %v1271 = vmul.f32 %v1252, %v1261
        %v1273 = vlaneseq
        %v1274 = vshrl.u32 %v1273, 7
        %v1275 = vsub.s32 0, %v1274
        %v1276 = vrot.slane %v650, %v1275
        %v1277 = vlaneseq
        %v1278 = vshrl.u32 %v1277, 7
        %v1279 = vsub.s32 1, %v1278
        %v1280 = vrot.slane %v650, %v1279
        %v1283 = vadd.f32 %v1264, %v1276
        %v1284 = vadd.f32 %v1265, %v1280
        %v1285 = vadd.f32 %v1266, %v1276
        %v1286 = vadd.f32 %v1267, %v1280
        %v1287 = vadd.f32 %v1268, %v1276
        %v1288 = vadd.f32 %v1269, %v1280
        %v1289 = vadd.f32 %v1270, %v1276
        %v1290 = vadd.f32 %v1271, %v1280
        %1292 = vset.pattern.permute.xlu0 0
        %1293 = vperm.xlu0 %1292, %v655
        %v1294 = vpop.permute.xlu0 %1293
        %1297 = vset.pattern.permute.xlu0 0
        %1298 = vperm.xlu0 %1297, %v656
        %v1299 = vpop.permute.xlu0 %1298
        %1302 = vset.pattern.permute.xlu0 0
        %1303 = vperm.xlu0 %1302, %v657
        %v1304 = vpop.permute.xlu0 %1303
        %1307 = vset.pattern.permute.xlu0 0
        %1308 = vperm.xlu0 %1307, %v658
        %v1309 = vpop.permute.xlu0 %1308
        %vm1311 = vcmask 228352
        %v1313 = vsel %vm1311, %v651, 0
        %v1316 = vsel %vm1311, %v652, 0
        %v1319 = vsel %vm1311, %v653, 0
        %v1322 = vsel %vm1311, %v654, 0
        %v1325 = vsel %vm694, %v1289, 0
        %v1328 = vsel %vm694, %v1290, 0
        %1330 = vmatprep.subr.mxu0 0.0
        %1331 = vmatpush1.msra.mxu0 0.0
        %1332 = vmatprep.subr.mxu0 0.0
        %1333 = vmatpush1.msra.mxu0 0.0
        %1334 = vmatprep.subr.mxu0 0.0
        %1335 = vmatpush1.msra.mxu0 0.0
        %1336 = vmatprep.subr.mxu0 0.0
        %1337 = vmatpush1.msra.mxu0 0.0
        %1338 = vmatprep.subr.mxu0 0.0
        %1339 = vmatpush1.msra.mxu0 0.0
        %1340 = vmatprep.subr.mxu0 0.0
        %1341 = vmatpush1.msra.mxu0 0.0
        %1342 = vmatprep.subr.mxu0 0.0
        %1343 = vmatpush1.msra.mxu0 0.0
        %1344 = vmatprep.subr.mxu0 0.0
        %1345 = vmatpush1.msra.mxu0 0.0
        %1346 = vmatprep.subr.mxu0 0.0
        %1347 = vmatpush1.msra.mxu0 0.0
        %1348 = vmatprep.subr.mxu0 0.0
        %1349 = vmatpush1.msra.mxu0 0.0
        %1350 = vmatprep.subr.mxu0 0.0
        %1351 = vmatpush1.msra.mxu0 0.0
        %1352 = vmatprep.subr.mxu0 0.0
        %1353 = vmatpush1.msra.mxu0 0.0
        %1354 = vmatprep.subr.mxu0 %v1328
        %1355 = vmatpush1.msra.mxu0 %v1325
        %1356 = vmatprep.subr.mxu0 %v1288
        %1357 = vmatpush1.msra.mxu0 %v1287
        %1358 = vmatprep.subr.mxu0 %v1286
        %1359 = vmatpush1.msra.mxu0 %v1285
        %1360 = vmatprep.subr.mxu0 %v1284
        %1361 = vmatpush1.msra.mxu0 %v1283
        %1362 = vmatprep.subr.mxu0 0.0
        %1363 = vmatpush2.msra.mxu0 0.0
        %1364 = vmatprep.subr.mxu0 0.0
        %1365 = vmatpush2.msra.mxu0 0.0
        %1366 = vmatprep.subr.mxu0 0.0
        %1367 = vmatpush2.msra.mxu0 0.0
        %1368 = vmatprep.subr.mxu0 0.0
        %1369 = vmatpush2.msra.mxu0 0.0
        %1370 = vmatprep.subr.mxu0 0.0
        %1371 = vmatpush2.msra.mxu0 0.0
        %1372 = vmatprep.subr.mxu0 0.0
        %1373 = vmatpush2.msra.mxu0 0.0
        %1374 = vmatprep.subr.mxu0 0.0
        %1375 = vmatpush2.msra.mxu0 0.0
        %1376 = vmatprep.subr.mxu0 0.0
        %1377 = vmatpush2.msra.mxu0 0.0
        %1378 = vmatprep.subr.mxu0 0.0
        %1379 = vmatpush2.msra.mxu0 0.0
        %1380 = vmatprep.subr.mxu0 0.0
        %1381 = vmatpush2.msra.mxu0 0.0
        %1382 = vmatprep.subr.mxu0 0.0
        %1383 = vmatpush2.msra.mxu0 0.0
        %1384 = vmatprep.subr.mxu0 0.0
        %1385 = vmatpush2.msra.mxu0 0.0
        %1386 = vmatprep.subr.mxu0 0.0
        %1387 = vmatpush2.msra.mxu0 0.0
        %1388 = vmatprep.subr.mxu0 0.0
        %1389 = vmatpush2.msra.mxu0 0.0
        %1390 = vmatprep.subr.mxu0 0.0
        %1391 = vmatpush2.msra.mxu0 0.0
        %1392 = vmatprep.subr.mxu0 0.0
        %1393 = vmatpush2.msra.mxu0 0.0
        %1394 = vmatprep.mubr.f32.mxu0 0.0
        %1395 = vmatmul.mubr.f32.gmra.mxu0 %v1313
        %v1396 = vpop.f32.mrf.mxu0
        %v1397 = vadd.f32 %v1294, %v1396
        %v1398 = vpop.f32.mrf.mxu0
        %v1399 = vadd.f32 %v1294, %v1398
        %1400 = vmatprep.mubr.f32.mxu0 0.0
        %1401 = vmatmul.mubr.f32.gmra.mxu0 %v1316
        %v1402 = vpop.f32.mrf.mxu0
        %v1403 = vadd.f32 %v1299, %v1402
        %v1404 = vpop.f32.mrf.mxu0
        %v1405 = vadd.f32 %v1299, %v1404
        %1406 = vmatprep.mubr.f32.mxu0 0.0
        %1407 = vmatmul.mubr.f32.gmra.mxu0 %v1319
        %v1408 = vpop.f32.mrf.mxu0
        %v1409 = vadd.f32 %v1304, %v1408
        %v1410 = vpop.f32.mrf.mxu0
        %v1411 = vadd.f32 %v1304, %v1410
        %1412 = vmatprep.mubr.f32.mxu0 0.0
        %1413 = vmatmul.mubr.f32.gmra.mxu0 %v1322
        %v1414 = vpop.f32.mrf.mxu0
        %v1415 = vadd.f32 %v1309, %v1414
        %v1416 = vpop.f32.mrf.mxu0
        %v1417 = vadd.f32 %v1309, %v1416
        %1418 = vdwg.mxu0
        %v1419 = vadd.f32 %v1397, %v633
        %v1420 = vadd.f32 %v1399, %v634
        %v1421 = vadd.f32 %v1403, %v635
        %v1422 = vadd.f32 %v1405, %v636
        %v1423 = vadd.f32 %v1409, %v637
        %v1424 = vadd.f32 %v1411, %v638
        %v1425 = vadd.f32 %v1415, %v639
        %v1426 = vadd.f32 %v1417, %v640
        %v1427 = vld [vmem:[%s9] sm:$0xff]
        %v1428 = vld [vmem:[%s9 + $0x8] sm:$0xff]
        %v1429 = vld [vmem:[%s9 + $0x10] sm:$0xff]
        %v1430 = vld [vmem:[%s9 + $0x18] sm:$0xf]
        %v1431 = vld [vmem:[%s10] sm:$0xff]
        %v1432 = vld [vmem:[%s10 + $0x8] sm:$0xff]
        %v1433 = vld [vmem:[%s10 + $0x10] sm:$0xff]
        %v1434 = vld [vmem:[%s10 + $0x18] sm:$0xf]
        %v1435 = vld [vmem:[%s11] sm:$0x3]
        %v1436 = vld [vmem:[%s12] sm:$0x3]
        %v1437 = vld [vmem:[%s13] sm:$0xff]
        %v1438 = vld [vmem:[%s13 + $0x8] sm:$0xff]
        %v1439 = vld [vmem:[%s13 + $0x10] sm:$0xff]
        %v1440 = vld [vmem:[%s13 + $0x18] sm:$0xf]
        %v1441 = vld [vmem:[%s14] sm:$0xff]
        %v1442 = vld [vmem:[%s14 + $0x8] sm:$0xff]
        %v1443 = vld [vmem:[%s14 + $0x10] sm:$0xff]
        %v1444 = vld [vmem:[%s14 + $0x18] sm:$0xf]
        %v1445 = vld [vmem:[%s15] sm:$0xff]
        %v1446 = vld [vmem:[%s15 + $0x8] sm:$0xff]
        %v1447 = vld [vmem:[%s15 + $0x10] sm:$0xff]
        %v1448 = vld [vmem:[%s15 + $0x18] sm:$0xff]
        %v1449 = vld [vmem:[%s15 + $0x20] sm:$0xff]
        %v1450 = vld [vmem:[%s15 + $0x28] sm:$0xff]
        %v1451 = vld [vmem:[%s15 + $0x30] sm:$0xff]
        %v1452 = vld [vmem:[%s15 + $0x38] sm:$0xff]
        %v1453 = vld [vmem:[%s15 + $0x40] sm:$0xff]
        %v1454 = vld [vmem:[%s15 + $0x48] sm:$0xff]
        %v1455 = vld [vmem:[%s15 + $0x50] sm:$0xff]
        %v1456 = vld [vmem:[%s15 + $0x58] sm:$0xff]
        %v1457 = vld [vmem:[%s15 + $0x60] sm:$0xff]
        %v1458 = vld [vmem:[%s15 + $0x68] sm:$0xff]
        %v1459 = vld [vmem:[%s15 + $0x70] sm:$0xff]
        %v1460 = vld [vmem:[%s15 + $0x78] sm:$0xff]
        %v1461 = vld [vmem:[%s15 + $0x80] sm:$0xff]
        %v1462 = vld [vmem:[%s15 + $0x88] sm:$0xff]
        %v1463 = vld [vmem:[%s15 + $0x90] sm:$0xff]
        %v1464 = vld [vmem:[%s15 + $0x98] sm:$0xff]
        %v1465 = vld [vmem:[%s15 + $0xa0] sm:$0xff]
        %v1466 = vld [vmem:[%s15 + $0xa8] sm:$0xff]
        %v1467 = vld [vmem:[%s15 + $0xb0] sm:$0xff]
        %v1468 = vld [vmem:[%s15 + $0xb8] sm:$0xff]
        %v1469 = vld [vmem:[%s15 + $0xc0] sm:$0xff]
        %v1470 = vld [vmem:[%s15 + $0xc8] sm:$0xff]
        %v1471 = vld [vmem:[%s15 + $0xd0] sm:$0xff]
        %v1472 = vld [vmem:[%s15 + $0xd8] sm:$0xff]
        %v1473 = vld [vmem:[%s15 + $0xe0] sm:$0xff]
        %v1474 = vld [vmem:[%s15 + $0xe8] sm:$0xff]
        %v1475 = vld [vmem:[%s15 + $0xf0] sm:$0xff]
        %v1476 = vld [vmem:[%s15 + $0xf8] sm:$0xff]
        %v1477 = vld [vmem:[%s16] sm:$0xff]
        %v1478 = vadd.f32 %v1419, %v1421
        %v1479 = vadd.f32 %v1478, %v1423
        %v1480 = vsel %vm694, %v1425, 0.0
        %v1481 = vadd.f32 %v1479, %v1480
        %v1482 = vrot.slane %v1481, 4
        %v1483 = vadd.f32 %v1481, %v1482
        %v1484 = vrot.slane %v1483, 2
        %v1485 = vadd.f32 %v1483, %v1484
        %v1486 = vrot.slane %v1485, 1
        %v1487 = vadd.f32 %v1485, %v1486
        %v1488 = vadd.f32 %v1420, %v1422
        %v1489 = vadd.f32 %v1488, %v1424
        %v1490 = vsel %vm694, %v1426, 0.0
        %v1491 = vadd.f32 %v1489, %v1490
        %v1492 = vrot.slane %v1491, 4
        %v1493 = vadd.f32 %v1491, %v1492
        %v1494 = vrot.slane %v1493, 2
        %v1495 = vadd.f32 %v1493, %v1494
        %v1496 = vrot.slane %v1495, 1
        %v1497 = vadd.f32 %v1495, %v1496
        %v1498 = vmul.f32 %v1487, %v713
        %v1499 = vmul.f32 %v1497, %v713
        %v1500 = vsub.f32 %v1419, %v1498
        %v1501 = vsub.f32 %v1420, %v1499
        %v1502 = vsub.f32 %v1421, %v1498
        %v1503 = vsub.f32 %v1422, %v1499
        %v1504 = vsub.f32 %v1423, %v1498
        %v1505 = vsub.f32 %v1424, %v1499
        %v1506 = vsub.f32 %v1425, %v1498
        %v1507 = vsub.f32 %v1426, %v1499
        %v1508 = vmul.f32 %v1500, %v1500
        %v1509 = vmul.f32 %v1501, %v1501
        %v1510 = vmul.f32 %v1502, %v1502
        %v1511 = vmul.f32 %v1503, %v1503
        %v1512 = vmul.f32 %v1504, %v1504
        %v1513 = vmul.f32 %v1505, %v1505
        %v1514 = vmul.f32 %v1506, %v1506
        %v1515 = vmul.f32 %v1507, %v1507
        %v1516 = vadd.f32 %v1508, %v1510
        %v1517 = vadd.f32 %v1516, %v1512
        %v1518 = vsel %vm694, %v1514, 0.0
        %v1519 = vadd.f32 %v1517, %v1518
        %v1520 = vrot.slane %v1519, 4
        %v1521 = vadd.f32 %v1519, %v1520
        %v1522 = vrot.slane %v1521, 2
        %v1523 = vadd.f32 %v1521, %v1522
        %v1524 = vrot.slane %v1523, 1
        %v1525 = vadd.f32 %v1523, %v1524
        %v1526 = vadd.f32 %v1509, %v1511
        %v1527 = vadd.f32 %v1526, %v1513
        %v1528 = vsel %vm694, %v1515, 0.0
        %v1529 = vadd.f32 %v1527, %v1528
        %v1530 = vrot.slane %v1529, 4
        %v1531 = vadd.f32 %v1529, %v1530
        %v1532 = vrot.slane %v1531, 2
        %v1533 = vadd.f32 %v1531, %v1532
        %v1534 = vrot.slane %v1533, 1
        %v1535 = vadd.f32 %v1533, %v1534
        %v1536 = vmul.f32 %v1525, %v713
        %v1537 = vmul.f32 %v1535, %v713
        %v1538 = vadd.f32 %v1536, 1e-05
        %v1539 = vadd.f32 %v1537, 1e-05
        %v1540 = vrsqrt.pop %v1538
        %v1541 = vrsqrt.pop %v1539
        %v1542 = vmul.f32 %v1500, %v1540
        %v1543 = vmul.f32 %v1501, %v1541
        %v1544 = vmul.f32 %v1502, %v1540
        %v1545 = vmul.f32 %v1503, %v1541
        %v1546 = vmul.f32 %v1504, %v1540
        %v1547 = vmul.f32 %v1505, %v1541
        %v1548 = vmul.f32 %v1506, %v1540
        %v1549 = vmul.f32 %v1507, %v1541
        %1551 = vset.pattern.permute.xlu0 0
        %1552 = vperm.xlu0 %1551, %v1427
        %v1553 = vpop.permute.xlu0 %1552
        %1556 = vset.pattern.permute.xlu0 0
        %1557 = vperm.xlu0 %1556, %v1428
        %v1558 = vpop.permute.xlu0 %1557
        %1561 = vset.pattern.permute.xlu0 0
        %1562 = vperm.xlu0 %1561, %v1429
        %v1563 = vpop.permute.xlu0 %1562
        %1566 = vset.pattern.permute.xlu0 0
        %1567 = vperm.xlu0 %1566, %v1430
        %v1568 = vpop.permute.xlu0 %1567
        %v1570 = vmul.f32 %v1542, %v1553
        %v1571 = vmul.f32 %v1543, %v1553
        %v1572 = vmul.f32 %v1544, %v1558
        %v1573 = vmul.f32 %v1545, %v1558
        %v1574 = vmul.f32 %v1546, %v1563
        %v1575 = vmul.f32 %v1547, %v1563
        %v1576 = vmul.f32 %v1548, %v1568
        %v1577 = vmul.f32 %v1549, %v1568
        %1579 = vset.pattern.permute.xlu0 0
        %1580 = vperm.xlu0 %1579, %v1431
        %v1581 = vpop.permute.xlu0 %1580
        %1584 = vset.pattern.permute.xlu0 0
        %1585 = vperm.xlu0 %1584, %v1432
        %v1586 = vpop.permute.xlu0 %1585
        %1589 = vset.pattern.permute.xlu0 0
        %1590 = vperm.xlu0 %1589, %v1433
        %v1591 = vpop.permute.xlu0 %1590
        %1594 = vset.pattern.permute.xlu0 0
        %1595 = vperm.xlu0 %1594, %v1434
        %v1596 = vpop.permute.xlu0 %1595
        %v1598 = vadd.f32 %v1570, %v1581
        %v1599 = vadd.f32 %v1571, %v1581
        %v1600 = vadd.f32 %v1572, %v1586
        %v1601 = vadd.f32 %v1573, %v1586
        %v1602 = vadd.f32 %v1574, %v1591
        %v1603 = vadd.f32 %v1575, %v1591
        %v1604 = vadd.f32 %v1576, %v1596
        %v1605 = vadd.f32 %v1577, %v1596
        %v1606 = vmul.f32 %v1598, %v1598
        %v1607 = vmul.f32 %v1599, %v1599
        %v1608 = vmul.f32 %v1600, %v1600
        %v1609 = vmul.f32 %v1601, %v1601
        %v1610 = vmul.f32 %v1602, %v1602
        %v1611 = vmul.f32 %v1603, %v1603
        %v1612 = vmul.f32 %v1604, %v1604
        %v1613 = vmul.f32 %v1605, %v1605
        %1614 = vmatprep.subr.mxu0 0.0
        %1615 = vmatpush1.msra.mxu0 %v1460
        %1616 = vmatprep.subr.mxu0 0.0
        %1617 = vmatpush1.msra.mxu0 %v1459
        %1618 = vmatprep.subr.mxu0 0.0
        %1619 = vmatpush1.msra.mxu0 %v1458
        %1620 = vmatprep.subr.mxu0 0.0
        %1621 = vmatpush1.msra.mxu0 %v1457
        %1622 = vmatprep.subr.mxu0 0.0
        %1623 = vmatpush1.msra.mxu0 %v1456
        %1624 = vmatprep.subr.mxu0 0.0
        %1625 = vmatpush1.msra.mxu0 %v1455
        %1626 = vmatprep.subr.mxu0 0.0
        %1627 = vmatpush1.msra.mxu0 %v1454
        %1628 = vmatprep.subr.mxu0 0.0
        %1629 = vmatpush1.msra.mxu0 %v1453
        %1630 = vmatprep.subr.mxu0 0.0
        %1631 = vmatpush1.msra.mxu0 %v1452
        %1632 = vmatprep.subr.mxu0 0.0
        %1633 = vmatpush1.msra.mxu0 %v1451
        %1634 = vmatprep.subr.mxu0 0.0
        %1635 = vmatpush1.msra.mxu0 %v1450
        %1636 = vmatprep.subr.mxu0 0.0
        %1637 = vmatpush1.msra.mxu0 %v1449
        %1638 = vmatprep.subr.mxu0 0.0
        %1639 = vmatpush1.msra.mxu0 %v1448
        %1640 = vmatprep.subr.mxu0 0.0
        %1641 = vmatpush1.msra.mxu0 %v1447
        %1642 = vmatprep.subr.mxu0 0.0
        %1643 = vmatpush1.msra.mxu0 %v1446
        %1644 = vmatprep.subr.mxu0 0.0
        %1645 = vmatpush1.msra.mxu0 %v1445
        %1646 = vmatprep.subr.mxu0 0.0
        %1647 = vmatpush2.msra.mxu0 %v1476
        %1648 = vmatprep.subr.mxu0 0.0
        %1649 = vmatpush2.msra.mxu0 %v1475
        %1650 = vmatprep.subr.mxu0 0.0
        %1651 = vmatpush2.msra.mxu0 %v1474
        %1652 = vmatprep.subr.mxu0 0.0
        %1653 = vmatpush2.msra.mxu0 %v1473
        %1654 = vmatprep.subr.mxu0 0.0
        %1655 = vmatpush2.msra.mxu0 %v1472
        %1656 = vmatprep.subr.mxu0 0.0
        %1657 = vmatpush2.msra.mxu0 %v1471
        %1658 = vmatprep.subr.mxu0 0.0
        %1659 = vmatpush2.msra.mxu0 %v1470
        %1660 = vmatprep.subr.mxu0 0.0
        %1661 = vmatpush2.msra.mxu0 %v1469
        %1662 = vmatprep.subr.mxu0 0.0
        %1663 = vmatpush2.msra.mxu0 %v1468
        %1664 = vmatprep.subr.mxu0 0.0
        %1665 = vmatpush2.msra.mxu0 %v1467
        %1666 = vmatprep.subr.mxu0 0.0
        %1667 = vmatpush2.msra.mxu0 %v1466
        %1668 = vmatprep.subr.mxu0 0.0
        %1669 = vmatpush2.msra.mxu0 %v1465
        %1670 = vmatprep.subr.mxu0 0.0
        %1671 = vmatpush2.msra.mxu0 %v1464
        %1672 = vmatprep.subr.mxu0 0.0
        %1673 = vmatpush2.msra.mxu0 %v1463
        %1674 = vmatprep.subr.mxu0 0.0
        %1675 = vmatpush2.msra.mxu0 %v1462
        %1676 = vmatprep.subr.mxu0 0.0
        %1677 = vmatpush2.msra.mxu0 %v1461
        %1678 = vmatprep.mubr.f32.mxu0 %v1599
        %1679 = vmatmul.mubr.f32.gmra.mxu0 %v1598
        %v1680 = vpop.f32.mrf.mxu0
        %v1681 = vadd.f32 0.0, %v1680
        %v1682 = vpop.f32.mrf.mxu0
        %1683 = vmatprep.mubr.f32.mxu0 %v1601
        %1684 = vmatmul.mubr.f32.gmra.mxu0 %v1600
        %v1685 = vpop.f32.mrf.mxu0
        %v1686 = vadd.f32 0.0, %v1685
        %v1687 = vpop.f32.mrf.mxu0
        %1688 = vmatprep.mubr.f32.mxu0 %v1603
        %1689 = vmatmul.mubr.f32.gmra.mxu0 %v1602
        %v1690 = vpop.f32.mrf.mxu0
        %v1691 = vadd.f32 0.0, %v1690
        %v1692 = vpop.f32.mrf.mxu0
        %1693 = vmatprep.mubr.f32.mxu0 %v1605
        %1694 = vmatmul.mubr.f32.gmra.mxu0 %v1604
        %v1695 = vpop.f32.mrf.mxu0
        %v1696 = vadd.f32 0.0, %v1695
        %v1697 = vpop.f32.mrf.mxu0
        %1698 = vdwg.mxu0
        %v1699 = vmul.f32 %v1681, 0.015625
        %v1700 = vmul.f32 %v1686, 0.015625
        %v1701 = vmul.f32 %v1691, 0.015625
        %v1702 = vmul.f32 %v1696, 0.015625
        %1703 = vmatprep.subr.mxu0 0.0
        %1704 = vmatpush1.msra.mxu0 %v1460
        %1705 = vmatprep.subr.mxu0 0.0
        %1706 = vmatpush1.msra.mxu0 %v1459
        %1707 = vmatprep.subr.mxu0 0.0
        %1708 = vmatpush1.msra.mxu0 %v1458
        %1709 = vmatprep.subr.mxu0 0.0
        %1710 = vmatpush1.msra.mxu0 %v1457
        %1711 = vmatprep.subr.mxu0 0.0
        %1712 = vmatpush1.msra.mxu0 %v1456
        %1713 = vmatprep.subr.mxu0 0.0
        %1714 = vmatpush1.msra.mxu0 %v1455
        %1715 = vmatprep.subr.mxu0 0.0
        %1716 = vmatpush1.msra.mxu0 %v1454
        %1717 = vmatprep.subr.mxu0 0.0
        %1718 = vmatpush1.msra.mxu0 %v1453
        %1719 = vmatprep.subr.mxu0 0.0
        %1720 = vmatpush1.msra.mxu0 %v1452
        %1721 = vmatprep.subr.mxu0 0.0
        %1722 = vmatpush1.msra.mxu0 %v1451
        %1723 = vmatprep.subr.mxu0 0.0
        %1724 = vmatpush1.msra.mxu0 %v1450
        %1725 = vmatprep.subr.mxu0 0.0
        %1726 = vmatpush1.msra.mxu0 %v1449
        %1727 = vmatprep.subr.mxu0 0.0
        %1728 = vmatpush1.msra.mxu0 %v1448
        %1729 = vmatprep.subr.mxu0 0.0
        %1730 = vmatpush1.msra.mxu0 %v1447
        %1731 = vmatprep.subr.mxu0 0.0
        %1732 = vmatpush1.msra.mxu0 %v1446
        %1733 = vmatprep.subr.mxu0 0.0
        %1734 = vmatpush1.msra.mxu0 %v1445
        %1735 = vmatprep.subr.mxu0 0.0
        %1736 = vmatpush2.msra.mxu0 %v1476
        %1737 = vmatprep.subr.mxu0 0.0
        %1738 = vmatpush2.msra.mxu0 %v1475
        %1739 = vmatprep.subr.mxu0 0.0
        %1740 = vmatpush2.msra.mxu0 %v1474
        %1741 = vmatprep.subr.mxu0 0.0
        %1742 = vmatpush2.msra.mxu0 %v1473
        %1743 = vmatprep.subr.mxu0 0.0
        %1744 = vmatpush2.msra.mxu0 %v1472
        %1745 = vmatprep.subr.mxu0 0.0
        %1746 = vmatpush2.msra.mxu0 %v1471
        %1747 = vmatprep.subr.mxu0 0.0
        %1748 = vmatpush2.msra.mxu0 %v1470
        %1749 = vmatprep.subr.mxu0 0.0
        %1750 = vmatpush2.msra.mxu0 %v1469
        %1751 = vmatprep.subr.mxu0 0.0
        %1752 = vmatpush2.msra.mxu0 %v1468
        %1753 = vmatprep.subr.mxu0 0.0
        %1754 = vmatpush2.msra.mxu0 %v1467
        %1755 = vmatprep.subr.mxu0 0.0
        %1756 = vmatpush2.msra.mxu0 %v1466
        %1757 = vmatprep.subr.mxu0 0.0
        %1758 = vmatpush2.msra.mxu0 %v1465
        %1759 = vmatprep.subr.mxu0 0.0
        %1760 = vmatpush2.msra.mxu0 %v1464
        %1761 = vmatprep.subr.mxu0 0.0
        %1762 = vmatpush2.msra.mxu0 %v1463
        %1763 = vmatprep.subr.mxu0 0.0
        %1764 = vmatpush2.msra.mxu0 %v1462
        %1765 = vmatprep.subr.mxu0 0.0
        %1766 = vmatpush2.msra.mxu0 %v1461
        %1767 = vmatprep.mubr.f32.mxu0 %v1607
        %1768 = vmatmul.mubr.f32.gmra.mxu0 %v1606
        %v1769 = vpop.f32.mrf.mxu0
        %v1770 = vadd.f32 0.0, %v1769
        %v1771 = vpop.f32.mrf.mxu0
        %1772 = vmatprep.mubr.f32.mxu0 %v1609
        %1773 = vmatmul.mubr.f32.gmra.mxu0 %v1608
        %v1774 = vpop.f32.mrf.mxu0
        %v1775 = vadd.f32 0.0, %v1774
        %v1776 = vpop.f32.mrf.mxu0
        %1777 = vmatprep.mubr.f32.mxu0 %v1611
        %1778 = vmatmul.mubr.f32.gmra.mxu0 %v1610
        %v1779 = vpop.f32.mrf.mxu0
        %v1780 = vadd.f32 0.0, %v1779
        %v1781 = vpop.f32.mrf.mxu0
        %1782 = vmatprep.mubr.f32.mxu0 %v1613
        %1783 = vmatmul.mubr.f32.gmra.mxu0 %v1612
        %v1784 = vpop.f32.mrf.mxu0
        %v1785 = vadd.f32 0.0, %v1784
        %v1786 = vpop.f32.mrf.mxu0
        %1787 = vdwg.mxu0
        %v1788 = vmul.f32 %v1770, 0.015625
        %v1789 = vmul.f32 %v1775, 0.015625
        %v1790 = vmul.f32 %v1780, 0.015625
        %v1791 = vmul.f32 %v1785, 0.015625
        %v1792 = vmul.f32 %v1699, %v1699
        %v1793 = vmul.f32 %v1700, %v1700
        %v1794 = vmul.f32 %v1701, %v1701
        %v1795 = vmul.f32 %v1702, %v1702
        %v1796 = vsub.f32 %v1788, %v1792
        %v1797 = vsub.f32 %v1789, %v1793
        %v1798 = vsub.f32 %v1790, %v1794
        %v1799 = vsub.f32 %v1791, %v1795
        %v1800 = vmax.f32 %v1796, 0.0
        %v1801 = vmax.f32 %v1797, 0.0
        %v1802 = vmax.f32 %v1798, 0.0
        %v1803 = vmax.f32 %v1799, 0.0
        %v1804 = vadd.f32 %v1800, 1e-05
        %v1805 = vadd.f32 %v1801, 1e-05
        %v1806 = vadd.f32 %v1802, 1e-05
        %v1807 = vadd.f32 %v1803, 1e-05
        %v1808 = vrsqrt.pop %v1804
        %v1809 = vrsqrt.pop %v1805
        %v1810 = vrsqrt.pop %v1806
        %v1811 = vrsqrt.pop %v1807
        %v1813 = vcombine.high %v1477, %v1477
        %v1815 = vsel %vm1030, %v1699, 0
        %v1818 = vsel %vm1030, %v1700, 0
        %v1821 = vsel %vm1030, %v1701, 0
        %v1824 = vsel %vm1030, %v1702, 0
        %v1826 = vsel %vm694, %v1477, 0
        %v1828 = vsel %vm694, %v1813, 0
        %1830 = vmatprep.subr.mxu0 0.0
        %1831 = vmatpush1.msra.mxu0 0.0
        %1832 = vmatprep.subr.mxu0 0.0
        %1833 = vmatpush1.msra.mxu0 0.0
        %1834 = vmatprep.subr.mxu0 0.0
        %1835 = vmatpush1.msra.mxu0 0.0
        %1836 = vmatprep.subr.mxu0 0.0
        %1837 = vmatpush1.msra.mxu0 0.0
        %1838 = vmatprep.subr.mxu0 0.0
        %1839 = vmatpush1.msra.mxu0 0.0
        %1840 = vmatprep.subr.mxu0 0.0
        %1841 = vmatpush1.msra.mxu0 0.0
        %1842 = vmatprep.subr.mxu0 0.0
        %1843 = vmatpush1.msra.mxu0 0.0
        %1844 = vmatprep.subr.mxu0 0.0
        %1845 = vmatpush1.msra.mxu0 0.0
        %1846 = vmatprep.subr.mxu0 0.0
        %1847 = vmatpush1.msra.mxu0 0.0
        %1848 = vmatprep.subr.mxu0 0.0
        %1849 = vmatpush1.msra.mxu0 0.0
        %1850 = vmatprep.subr.mxu0 0.0
        %1851 = vmatpush1.msra.mxu0 0.0
        %1852 = vmatprep.subr.mxu0 0.0
        %1853 = vmatpush1.msra.mxu0 0.0
        %1854 = vmatprep.subr.mxu0 0.0
        %1855 = vmatpush1.msra.mxu0 0.0
        %1856 = vmatprep.subr.mxu0 0.0
        %1857 = vmatpush1.msra.mxu0 0.0
        %1858 = vmatprep.subr.mxu0 0.0
        %1859 = vmatpush1.msra.mxu0 0.0
        %1860 = vmatprep.subr.mxu0 %v1828
        %1861 = vmatpush1.msra.mxu0 %v1826
        %1862 = vmatprep.subr.mxu0 0.0
        %1863 = vmatpush2.msra.mxu0 0.0
        %1864 = vmatprep.subr.mxu0 0.0
        %1865 = vmatpush2.msra.mxu0 0.0
        %1866 = vmatprep.subr.mxu0 0.0
        %1867 = vmatpush2.msra.mxu0 0.0
        %1868 = vmatprep.subr.mxu0 0.0
        %1869 = vmatpush2.msra.mxu0 0.0
        %1870 = vmatprep.subr.mxu0 0.0
        %1871 = vmatpush2.msra.mxu0 0.0
        %1872 = vmatprep.subr.mxu0 0.0
        %1873 = vmatpush2.msra.mxu0 0.0
        %1874 = vmatprep.subr.mxu0 0.0
        %1875 = vmatpush2.msra.mxu0 0.0
        %1876 = vmatprep.subr.mxu0 0.0
        %1877 = vmatpush2.msra.mxu0 0.0
        %1878 = vmatprep.subr.mxu0 0.0
        %1879 = vmatpush2.msra.mxu0 0.0
        %1880 = vmatprep.subr.mxu0 0.0
        %1881 = vmatpush2.msra.mxu0 0.0
        %1882 = vmatprep.subr.mxu0 0.0
        %1883 = vmatpush2.msra.mxu0 0.0
        %1884 = vmatprep.subr.mxu0 0.0
        %1885 = vmatpush2.msra.mxu0 0.0
        %1886 = vmatprep.subr.mxu0 0.0
        %1887 = vmatpush2.msra.mxu0 0.0
        %1888 = vmatprep.subr.mxu0 0.0
        %1889 = vmatpush2.msra.mxu0 0.0
        %1890 = vmatprep.subr.mxu0 0.0
        %1891 = vmatpush2.msra.mxu0 0.0
        %1892 = vmatprep.subr.mxu0 0.0
        %1893 = vmatpush2.msra.mxu0 0.0
        %1894 = vmatprep.mubr.f32.mxu0 0.0
        %1895 = vmatmul.mubr.f32.gmra.mxu0 %v1815
        %v1896 = vpop.f32.mrf.mxu0
        %v1897 = vadd.f32 0.0, %v1896
        %v1898 = vpop.f32.mrf.mxu0
        %v1899 = vadd.f32 0.0, %v1898
        %1900 = vmatprep.mubr.f32.mxu0 0.0
        %1901 = vmatmul.mubr.f32.gmra.mxu0 %v1818
        %v1902 = vpop.f32.mrf.mxu0
        %v1903 = vadd.f32 0.0, %v1902
        %v1904 = vpop.f32.mrf.mxu0
        %v1905 = vadd.f32 0.0, %v1904
        %1906 = vmatprep.mubr.f32.mxu0 0.0
        %1907 = vmatmul.mubr.f32.gmra.mxu0 %v1821
        %v1908 = vpop.f32.mrf.mxu0
        %v1909 = vadd.f32 0.0, %v1908
        %v1910 = vpop.f32.mrf.mxu0
        %v1911 = vadd.f32 0.0, %v1910
        %1912 = vmatprep.mubr.f32.mxu0 0.0
        %1913 = vmatmul.mubr.f32.gmra.mxu0 %v1824
        %v1914 = vpop.f32.mrf.mxu0
        %v1915 = vadd.f32 0.0, %v1914
        %v1916 = vpop.f32.mrf.mxu0
        %v1917 = vadd.f32 0.0, %v1916
        %1918 = vdwg.mxu0
        %v1920 = vsel %vm1030, %v1808, 0
        %v1923 = vsel %vm1030, %v1809, 0
        %v1926 = vsel %vm1030, %v1810, 0
        %v1929 = vsel %vm1030, %v1811, 0
        %1931 = vmatprep.subr.mxu0 0.0
        %1932 = vmatpush1.msra.mxu0 0.0
        %1933 = vmatprep.subr.mxu0 0.0
        %1934 = vmatpush1.msra.mxu0 0.0
        %1935 = vmatprep.subr.mxu0 0.0
        %1936 = vmatpush1.msra.mxu0 0.0
        %1937 = vmatprep.subr.mxu0 0.0
        %1938 = vmatpush1.msra.mxu0 0.0
        %1939 = vmatprep.subr.mxu0 0.0
        %1940 = vmatpush1.msra.mxu0 0.0
        %1941 = vmatprep.subr.mxu0 0.0
        %1942 = vmatpush1.msra.mxu0 0.0
        %1943 = vmatprep.subr.mxu0 0.0
        %1944 = vmatpush1.msra.mxu0 0.0
        %1945 = vmatprep.subr.mxu0 0.0
        %1946 = vmatpush1.msra.mxu0 0.0
        %1947 = vmatprep.subr.mxu0 0.0
        %1948 = vmatpush1.msra.mxu0 0.0
        %1949 = vmatprep.subr.mxu0 0.0
        %1950 = vmatpush1.msra.mxu0 0.0
        %1951 = vmatprep.subr.mxu0 0.0
        %1952 = vmatpush1.msra.mxu0 0.0
        %1953 = vmatprep.subr.mxu0 0.0
        %1954 = vmatpush1.msra.mxu0 0.0
        %1955 = vmatprep.subr.mxu0 0.0
        %1956 = vmatpush1.msra.mxu0 0.0
        %1957 = vmatprep.subr.mxu0 0.0
        %1958 = vmatpush1.msra.mxu0 0.0
        %1959 = vmatprep.subr.mxu0 0.0
        %1960 = vmatpush1.msra.mxu0 0.0
        %1961 = vmatprep.subr.mxu0 %v1828
        %1962 = vmatpush1.msra.mxu0 %v1826
        %1963 = vmatprep.subr.mxu0 0.0
        %1964 = vmatpush2.msra.mxu0 0.0
        %1965 = vmatprep.subr.mxu0 0.0
        %1966 = vmatpush2.msra.mxu0 0.0
        %1967 = vmatprep.subr.mxu0 0.0
        %1968 = vmatpush2.msra.mxu0 0.0
        %1969 = vmatprep.subr.mxu0 0.0
        %1970 = vmatpush2.msra.mxu0 0.0
        %1971 = vmatprep.subr.mxu0 0.0
        %1972 = vmatpush2.msra.mxu0 0.0
        %1973 = vmatprep.subr.mxu0 0.0
        %1974 = vmatpush2.msra.mxu0 0.0
        %1975 = vmatprep.subr.mxu0 0.0
        %1976 = vmatpush2.msra.mxu0 0.0
        %1977 = vmatprep.subr.mxu0 0.0
        %1978 = vmatpush2.msra.mxu0 0.0
        %1979 = vmatprep.subr.mxu0 0.0
        %1980 = vmatpush2.msra.mxu0 0.0
        %1981 = vmatprep.subr.mxu0 0.0
        %1982 = vmatpush2.msra.mxu0 0.0
        %1983 = vmatprep.subr.mxu0 0.0
        %1984 = vmatpush2.msra.mxu0 0.0
        %1985 = vmatprep.subr.mxu0 0.0
        %1986 = vmatpush2.msra.mxu0 0.0
        %1987 = vmatprep.subr.mxu0 0.0
        %1988 = vmatpush2.msra.mxu0 0.0
        %1989 = vmatprep.subr.mxu0 0.0
        %1990 = vmatpush2.msra.mxu0 0.0
        %1991 = vmatprep.subr.mxu0 0.0
        %1992 = vmatpush2.msra.mxu0 0.0
        %1993 = vmatprep.subr.mxu0 0.0
        %1994 = vmatpush2.msra.mxu0 0.0
        %1995 = vmatprep.mubr.f32.mxu0 0.0
        %1996 = vmatmul.mubr.f32.gmra.mxu0 %v1920
        %v1997 = vpop.f32.mrf.mxu0
        %v1998 = vadd.f32 0.0, %v1997
        %v1999 = vpop.f32.mrf.mxu0
        %v2000 = vadd.f32 0.0, %v1999
        %2001 = vmatprep.mubr.f32.mxu0 0.0
        %2002 = vmatmul.mubr.f32.gmra.mxu0 %v1923
        %v2003 = vpop.f32.mrf.mxu0
        %v2004 = vadd.f32 0.0, %v2003
        %v2005 = vpop.f32.mrf.mxu0
        %v2006 = vadd.f32 0.0, %v2005
        %2007 = vmatprep.mubr.f32.mxu0 0.0
        %2008 = vmatmul.mubr.f32.gmra.mxu0 %v1926
        %v2009 = vpop.f32.mrf.mxu0
        %v2010 = vadd.f32 0.0, %v2009
        %v2011 = vpop.f32.mrf.mxu0
        %v2012 = vadd.f32 0.0, %v2011
        %2013 = vmatprep.mubr.f32.mxu0 0.0
        %2014 = vmatmul.mubr.f32.gmra.mxu0 %v1929
        %v2015 = vpop.f32.mrf.mxu0
        %v2016 = vadd.f32 0.0, %v2015
        %v2017 = vpop.f32.mrf.mxu0
        %v2018 = vadd.f32 0.0, %v2017
        %2019 = vdwg.mxu0
        %v2020 = vsub.f32 %v1598, %v1897
        %v2021 = vsub.f32 %v1599, %v1899
        %v2022 = vsub.f32 %v1600, %v1903
        %v2023 = vsub.f32 %v1601, %v1905
        %v2024 = vsub.f32 %v1602, %v1909
        %v2025 = vsub.f32 %v1603, %v1911
        %v2026 = vsub.f32 %v1604, %v1915
        %v2027 = vsub.f32 %v1605, %v1917
        %v2028 = vmul.f32 %v2020, %v1998
        %v2029 = vmul.f32 %v2021, %v2000
        %v2030 = vmul.f32 %v2022, %v2004
        %v2031 = vmul.f32 %v2023, %v2006
        %v2032 = vmul.f32 %v2024, %v2010
        %v2033 = vmul.f32 %v2025, %v2012
        %v2034 = vmul.f32 %v2026, %v2016
        %v2035 = vmul.f32 %v2027, %v2018
        %v2037 = vlaneseq
        %v2038 = vshrl.u32 %v2037, 7
        %v2039 = vsub.s32 0, %v2038
        %v2040 = vrot.slane %v1435, %v2039
        %v2041 = vlaneseq
        %v2042 = vshrl.u32 %v2041, 7
        %v2043 = vsub.s32 1, %v2042
        %v2044 = vrot.slane %v1435, %v2043
        %v2047 = vmul.f32 %v2028, %v2040
        %v2048 = vmul.f32 %v2029, %v2044
        %v2049 = vmul.f32 %v2030, %v2040
        %v2050 = vmul.f32 %v2031, %v2044
        %v2051 = vmul.f32 %v2032, %v2040
        %v2052 = vmul.f32 %v2033, %v2044
        %v2053 = vmul.f32 %v2034, %v2040
        %v2054 = vmul.f32 %v2035, %v2044
        %v2056 = vlaneseq
        %v2057 = vshrl.u32 %v2056, 7
        %v2058 = vsub.s32 0, %v2057
        %v2059 = vrot.slane %v1436, %v2058
        %v2060 = vlaneseq
        %v2061 = vshrl.u32 %v2060, 7
        %v2062 = vsub.s32 1, %v2061
        %v2063 = vrot.slane %v1436, %v2062
        %v2066 = vadd.f32 %v2047, %v2059
        %v2067 = vadd.f32 %v2048, %v2063
        %v2068 = vadd.f32 %v2049, %v2059
        %v2069 = vadd.f32 %v2050, %v2063
        %v2070 = vadd.f32 %v2051, %v2059
        %v2071 = vadd.f32 %v2052, %v2063
        %v2072 = vadd.f32 %v2053, %v2059
        %v2073 = vadd.f32 %v2054, %v2063
        %2075 = vset.pattern.permute.xlu0 0
        %2076 = vperm.xlu0 %2075, %v1441
        %v2077 = vpop.permute.xlu0 %2076
        %2080 = vset.pattern.permute.xlu0 0
        %2081 = vperm.xlu0 %2080, %v1442
        %v2082 = vpop.permute.xlu0 %2081
        %2085 = vset.pattern.permute.xlu0 0
        %2086 = vperm.xlu0 %2085, %v1443
        %v2087 = vpop.permute.xlu0 %2086
        %2090 = vset.pattern.permute.xlu0 0
        %2091 = vperm.xlu0 %2090, %v1444
        %v2092 = vpop.permute.xlu0 %2091
        %v2095 = vsel %vm1311, %v1437, 0
        %v2098 = vsel %vm1311, %v1438, 0
        %v2101 = vsel %vm1311, %v1439, 0
        %v2104 = vsel %vm1311, %v1440, 0
        %v2107 = vsel %vm694, %v2072, 0
        %v2110 = vsel %vm694, %v2073, 0
        %2112 = vmatprep.subr.mxu0 0.0
        %2113 = vmatpush1.msra.mxu0 0.0
        %2114 = vmatprep.subr.mxu0 0.0
        %2115 = vmatpush1.msra.mxu0 0.0
        %2116 = vmatprep.subr.mxu0 0.0
        %2117 = vmatpush1.msra.mxu0 0.0
        %2118 = vmatprep.subr.mxu0 0.0
        %2119 = vmatpush1.msra.mxu0 0.0
        %2120 = vmatprep.subr.mxu0 0.0
        %2121 = vmatpush1.msra.mxu0 0.0
        %2122 = vmatprep.subr.mxu0 0.0
        %2123 = vmatpush1.msra.mxu0 0.0
        %2124 = vmatprep.subr.mxu0 0.0
        %2125 = vmatpush1.msra.mxu0 0.0
        %2126 = vmatprep.subr.mxu0 0.0
        %2127 = vmatpush1.msra.mxu0 0.0
        %2128 = vmatprep.subr.mxu0 0.0
        %2129 = vmatpush1.msra.mxu0 0.0
        %2130 = vmatprep.subr.mxu0 0.0
        %2131 = vmatpush1.msra.mxu0 0.0
        %2132 = vmatprep.subr.mxu0 0.0
        %2133 = vmatpush1.msra.mxu0 0.0
        %2134 = vmatprep.subr.mxu0 0.0
        %2135 = vmatpush1.msra.mxu0 0.0
        %2136 = vmatprep.subr.mxu0 %v2110
        %2137 = vmatpush1.msra.mxu0 %v2107
        %2138 = vmatprep.subr.mxu0 %v2071
        %2139 = vmatpush1.msra.mxu0 %v2070
        %2140 = vmatprep.subr.mxu0 %v2069
        %2141 = vmatpush1.msra.mxu0 %v2068
        %2142 = vmatprep.subr.mxu0 %v2067
        %2143 = vmatpush1.msra.mxu0 %v2066
        %2144 = vmatprep.subr.mxu0 0.0
        %2145 = vmatpush2.msra.mxu0 0.0
        %2146 = vmatprep.subr.mxu0 0.0
        %2147 = vmatpush2.msra.mxu0 0.0
        %2148 = vmatprep.subr.mxu0 0.0
        %2149 = vmatpush2.msra.mxu0 0.0
        %2150 = vmatprep.subr.mxu0 0.0
        %2151 = vmatpush2.msra.mxu0 0.0
        %2152 = vmatprep.subr.mxu0 0.0
        %2153 = vmatpush2.msra.mxu0 0.0
        %2154 = vmatprep.subr.mxu0 0.0
        %2155 = vmatpush2.msra.mxu0 0.0
        %2156 = vmatprep.subr.mxu0 0.0
        %2157 = vmatpush2.msra.mxu0 0.0
        %2158 = vmatprep.subr.mxu0 0.0
        %2159 = vmatpush2.msra.mxu0 0.0
        %2160 = vmatprep.subr.mxu0 0.0
        %2161 = vmatpush2.msra.mxu0 0.0
        %2162 = vmatprep.subr.mxu0 0.0
        %2163 = vmatpush2.msra.mxu0 0.0
        %2164 = vmatprep.subr.mxu0 0.0
        %2165 = vmatpush2.msra.mxu0 0.0
        %2166 = vmatprep.subr.mxu0 0.0
        %2167 = vmatpush2.msra.mxu0 0.0
        %2168 = vmatprep.subr.mxu0 0.0
        %2169 = vmatpush2.msra.mxu0 0.0
        %2170 = vmatprep.subr.mxu0 0.0
        %2171 = vmatpush2.msra.mxu0 0.0
        %2172 = vmatprep.subr.mxu0 0.0
        %2173 = vmatpush2.msra.mxu0 0.0
        %2174 = vmatprep.subr.mxu0 0.0
        %2175 = vmatpush2.msra.mxu0 0.0
        %2176 = vmatprep.mubr.f32.mxu0 0.0
        %2177 = vmatmul.mubr.f32.gmra.mxu0 %v2095
        %v2178 = vpop.f32.mrf.mxu0
        %v2179 = vadd.f32 %v2077, %v2178
        %v2180 = vpop.f32.mrf.mxu0
        %v2181 = vadd.f32 %v2077, %v2180
        %2182 = vmatprep.mubr.f32.mxu0 0.0
        %2183 = vmatmul.mubr.f32.gmra.mxu0 %v2098
        %v2184 = vpop.f32.mrf.mxu0
        %v2185 = vadd.f32 %v2082, %v2184
        %v2186 = vpop.f32.mrf.mxu0
        %v2187 = vadd.f32 %v2082, %v2186
        %2188 = vmatprep.mubr.f32.mxu0 0.0
        %2189 = vmatmul.mubr.f32.gmra.mxu0 %v2101
        %v2190 = vpop.f32.mrf.mxu0
        %v2191 = vadd.f32 %v2087, %v2190
        %v2192 = vpop.f32.mrf.mxu0
        %v2193 = vadd.f32 %v2087, %v2192
        %2194 = vmatprep.mubr.f32.mxu0 0.0
        %2195 = vmatmul.mubr.f32.gmra.mxu0 %v2104
        %v2196 = vpop.f32.mrf.mxu0
        %v2197 = vadd.f32 %v2092, %v2196
        %v2198 = vpop.f32.mrf.mxu0
        %v2199 = vadd.f32 %v2092, %v2198
        %2200 = vdwg.mxu0
        %v2201 = vadd.f32 %v2179, %v1419
        %v2202 = vadd.f32 %v2181, %v1420
        %v2203 = vadd.f32 %v2185, %v1421
        %v2204 = vadd.f32 %v2187, %v1422
        %v2205 = vadd.f32 %v2191, %v1423
        %v2206 = vadd.f32 %v2193, %v1424
        %v2207 = vadd.f32 %v2197, %v1425
        %v2208 = vadd.f32 %v2199, %v1426
        %2209 = vst [vmem:[%s632] sm:$0xff] %v2201
        %2210 = vst [vmem:[%s632 + $0x8] sm:$0xff] %v2202
        %2211 = vst [vmem:[%s632 + $0x10] sm:$0xff] %v2203
        %2212 = vst [vmem:[%s632 + $0x18] sm:$0xff] %v2204
        %2213 = vst [vmem:[%s632 + $0x20] sm:$0xff] %v2205
        %2214 = vst [vmem:[%s632 + $0x28] sm:$0xff] %v2206
        %2215 = vst [vmem:[%s632 + $0x30] sm:$0xf] %v2207
        %2216 = vst [vmem:[%s632 + $0x38] sm:$0xf] %v2208
        %p2217 = scmp.lt.s32.totalorder %s32, 1
        %s2218 = scalar_select %p2217, %s32, 1
        %s2219 = smul.addr %s2218, 8
        %s2220 = smul.addr %s2219, 8
        %s2221 = scalar_lea.vmem %s17, %s2220
        // Predicated region
        $region113: #{a_call__.1} parent=87 // pred_check
          %p2222 = pneg %p412
        $region114: #{a_call__.1} parent=87 // pred_check_branch
          %2224 = sbr.rel (%p2222) target = $region116
        $region115: #{a_call__.1} parent=87 // pred_region
          _
        $region116: #{a_call__.1} parent=87 // pred_fallthru
          _
      $region88: #{a_call__.1} parent=5 // pred_fallthru
        _
      %p2225 = scmp.le.s32.totalorder 2, %s27
      // Predicated region
      $region117: #{a_call__.1} parent=5 // pred_check
        %p2226 = pneg %p2225
      $region118: #{a_call__.1} parent=5 // pred_check_branch
        %2228 = sbr.rel (%p2226) target = $region120
      $region119: #{a_call__.1} parent=5 // pred_region
        %s2229 = ssub.s32 %s27, 2
        // Predicated region
        $region121: #{a_call__.1} parent=119 // pred_check
          %p2230 = pneg %p418
        $region122: #{a_call__.1} parent=119 // pred_check_branch
          %2232 = sbr.rel (%p2230) target = $region124
        $region123: #{a_call__.1} parent=119 // pred_region
          %p2233 = scmp.lt.s32.totalorder %s33, 1
          %s2234 = scalar_select %p2233, %s33, 1
          %s2235 = smul.addr %s2234, 8
          %s2236 = smul.addr %s2235, 8
          %s2237 = scalar_lea.vmem %s17, %s2236
        $region124: #{a_call__.1} parent=119 // pred_fallthru
          _
      $region120: #{a_call__.1} parent=5 // pred_fallthru
        _
    $region6: #{a_call__.1} parent=1 // loop_footer
      %s31 = sadd.s32 1, %s27
    $region7: #{a_call__.1} parent=1 // loop_footer_branch
      %26 = sbr.rel target = $region3
    $region8: #{a_call__.1} parent=1 // loop_exit
      _
    %2238 = vsyncpa [#allocation3], 1
    %s2239 = scalar_lea.sflag [#allocation3], 1
    %2240 = vsyncpa %s2239, 1
    %2241 = vsyncpa [#allocation5], 1
    %2242 = vsyncpa [#allocation8], 1
    %2243 = vsyncpa [#allocation11], 1

</llo_original>
